<compile_context>
chip_gen: v7x
topology: tpu7x:2x2x1
jax: 0.10.0
libtpu: 0.0.40
codegen_flags: <defaults>
</compile_context>

<pallas_src>
import math
import jax
import jax.numpy as jnp
from jax import lax
from jax.experimental import pallas as pl
from jax.experimental.pallas import tpu as pltpu

K = 5       # conv kernel size
PAD = 2     # "same" padding for k=5, stride=1
EPS = 1e-5  # nn.InstanceNorm2d default eps


def _make_kernel(H, W, Wp, L, cin, cout):
    HWg = H * Wp                 # flattened (H, Wp) output grid (lane-dense, %128 == 0)
    START = PAD * Wp + PAD       # flat offset of padded position (row=PAD, col=PAD)
    inv_hw = 1.0 / float(H * W)
    taps = [ky * Wp + kx for ky in range(K) for kx in range(K)]   # 25 static offsets

    def _inorm(conv, mask, g_ref, b_ref):
        # single-pass masked InstanceNorm (biased variance, matches nn.InstanceNorm2d)
        cm = conv * mask
        s1 = jnp.sum(cm, axis=1, keepdims=True)
        s2 = jnp.sum(cm * conv, axis=1, keepdims=True)
        m = s1 * inv_hw
        v = s2 * inv_hw - m * m
        return (conv - m) * lax.rsqrt(v + EPS) * g_ref[...] + b_ref[...]

    def kernel(x_ref, mask_ref, w1_ref, g1_ref, b1_ref, w2_ref, g2_ref, b2_ref,
               out_ref, patch_ref, hpad_ref):
        # x_ref    : (1, cin, L)    zero-padded input, flattened with row stride Wp
        # mask_ref : (1, HWg)       1.0 on valid columns (x < W), 0.0 on junk columns
        # w*_ref   : (cout, K*K*c)  conv weights in im2col layout (VMEM)
        # g*,b*    : (cout, 1)      InstanceNorm affine params
        # out_ref  : (1, cout, HWg) lane-dense output on the (H, Wp) grid
        # patch_ref: (K*K*cin, HWg) im2col scratch
        # hpad_ref : (cout, L)      padded intermediate, flattened with row stride Wp
        mask = mask_ref[...]

        # -------- conv1: im2col (each shifted slice loaded once, all channels) + MXU --------
        for kk, d in enumerate(taps):
            patch_ref[kk * cin:(kk + 1) * cin, :] = x_ref[0, :, d:d + HWg]
        conv = jnp.dot(w1_ref[...], patch_ref[...], preferred_element_type=jnp.float32)
        h = jnp.maximum(_inorm(conv, mask, g1_ref, b1_ref), 0.0) * mask

        # Place into the padded intermediate with one contiguous lane-dense store.
        # Junk columns were masked to exactly zero, so the store itself re-creates the
        # left/right zero padding; only the small head/tail borders need explicit zeros
        # (done every step -> correct even when the batch axis runs core-parallel).
        hpad_ref[:, :START] = jnp.zeros((cout, START), jnp.float32)
        hpad_ref[:, START + HWg:] = jnp.zeros((cout, L - START - HWg), jnp.float32)
        hpad_ref[:, START:START + HWg] = h

        # -------- conv2: im2col + MXU, InstanceNorm, residual add --------
        for kk, d in enumerate(taps):
            patch_ref[kk * cout:(kk + 1) * cout, :] = hpad_ref[:, d:d + HWg]
        conv2 = jnp.dot(w2_ref[...], patch_ref[...], preferred_element_type=jnp.float32)
        h2 = _inorm(conv2, mask, g2_ref, b2_ref)

        # residual: the original x on the (H, Wp) grid is x_ref[:, START:START+HWg]
        out_ref[0, :, :] = x_ref[0, :, START:START + HWg] + h2

    return kernel


def residual_block(x, w1, g1, b1, w2, g2, b2):
    """x: (N, C, H, W) f32; w1/w2: (C, C, K, K) f32; g*/b*: (C,) f32."""
    N, Cin, H, W = x.shape
    Cout = w1.shape[0]
    assert Cin == Cout, "residual add requires dim_in == dim_out"

    # Padded row stride Wp >= W + 2*PAD such that H*Wp % 128 == 0 (lane-dense grid).
    wmin = W + 2 * PAD
    step = 128 // math.gcd(H, 128)
    Wp = -(-wmin // step) * step
    if Wp > 4 * wmin:          # avoid blow-up when H doesn't divide 128 nicely
        Wp = wmin
    Hp = H + 2 * PAD
    HWg = H * Wp
    L = Hp * Wp + Wp           # tail so every tap slice [d, d + HWg) stays in-bounds

    # Layout plumbing (wrapper side): zero-pad, flatten to row stride Wp.
    # TODO(synk): at production sizes, fold this pad into the kernel (pre-zeroed VMEM
    # scratch) and tile H into row bands with a 4-row halo so scratch fits v7x VMEM.
    xpad = jnp.pad(x, ((0, 0), (0, 0), (PAD, PAD), (PAD, Wp - W - PAD)))
    xflat = jnp.pad(xpad.reshape(N, Cin, Hp * Wp), ((0, 0), (0, 0), (0, L - Hp * Wp)))

    # im2col weight layout: wmat[co, (ky*K + kx)*Cin + ci] = w[co, ci, ky, kx]
    T = K * K * Cin
    w1m = jnp.transpose(w1, (0, 2, 3, 1)).reshape(Cout, T)
    w2m = jnp.transpose(w2, (0, 2, 3, 1)).reshape(Cout, T)
    g1c, b1c = g1.reshape(Cout, 1), b1.reshape(Cout, 1)
    g2c, b2c = g2.reshape(Cout, 1), b2.reshape(Cout, 1)

    # valid-column mask on the flattened (H, Wp) grid
    mask = jnp.tile((jnp.arange(Wp) < W).astype(jnp.float32), (H,)).reshape(1, HWg)

    def full(shape):
        return pl.BlockSpec(shape, lambda n: (0,) * len(shape))

    out_flat = pl.pallas_call(
        _make_kernel(H, W, Wp, L, Cin, Cout),
        out_shape=jax.ShapeDtypeStruct((N, Cout, HWg), jnp.float32),
        grid=(N,),
        in_specs=[
            pl.BlockSpec((1, Cin, L), lambda n: (n, 0, 0)),
            full((1, HWg)),
            full((Cout, T)), full((Cout, 1)), full((Cout, 1)),   # w1, gamma1, beta1
            full((Cout, T)), full((Cout, 1)), full((Cout, 1)),   # w2, gamma2, beta2
        ],
        out_specs=pl.BlockSpec((1, Cout, HWg), lambda n: (n, 0, 0)),
        scratch_shapes=[
            pltpu.VMEM((T, HWg), jnp.float32),     # im2col patches
            pltpu.VMEM((Cout, L), jnp.float32),    # padded intermediate (flattened)
        ],
        compiler_params=pltpu.CompilerParams(dimension_semantics=("parallel",)),
    )(xflat, mask, w1m, g1c, b1c, w2m, g2c, b2c)

    # drop the junk columns of the lane-dense grid: (N, C, H, Wp) -> (N, C, H, W)
    return out_flat.reshape(N, Cout, H, Wp)[:, :, :, :W]


# ---------------------------- pure-JAX reference ----------------------------
def _instance_norm(x, gamma, beta, eps=EPS):
    m = jnp.mean(x, axis=(2, 3), keepdims=True)
    v = jnp.mean((x - m) ** 2, axis=(2, 3), keepdims=True)
    return (x - m) / jnp.sqrt(v + eps) * gamma[None, :, None, None] + beta[None, :, None, None]


def reference(x, w1, g1, b1, w2, g2, b2):
    dn = ("NCHW", "OIHW", "NCHW")
    h = lax.conv_general_dilated(x, w1, (1, 1), [(PAD, PAD), (PAD, PAD)],
                                 dimension_numbers=dn, precision=lax.Precision.HIGHEST)
    h = jax.nn.relu(_instance_norm(h, g1, b1))
    h = lax.conv_general_dilated(h, w2, (1, 1), [(PAD, PAD), (PAD, PAD)],
                                 dimension_numbers=dn, precision=lax.Precision.HIGHEST)
    h = _instance_norm(h, g2, b2)
    return x + h


if __name__ == "__main__":
    key = jax.random.PRNGKey(0)
    kx, k1, k2, kg1, kb1, kg2, kb2 = jax.random.split(key, 7)

    N, C, H, W = 2, 4, 16, 16          # dim_in == dim_out == 4
    x = jax.random.normal(kx, (N, C, H, W), jnp.float32)
    w1 = 0.1 * jax.random.normal(k1, (C, C, K, K), jnp.float32)
    w2 = 0.1 * jax.random.normal(k2, (C, C, K, K), jnp.float32)
    g1 = 1.0 + 0.1 * jax.random.normal(kg1, (C,), jnp.float32)
    b1 = 0.1 * jax.random.normal(kb1, (C,), jnp.float32)
    g2 = 1.0 + 0.1 * jax.random.normal(kg2, (C,), jnp.float32)
    b2 = 0.1 * jax.random.normal(kb2, (C,), jnp.float32)

    out = jax.block_until_ready(residual_block(x, w1, g1, b1, w2, g2, b2))

    ref = reference(x, w1, g1, b1, w2, g2, b2)
    assert out.shape == ref.shape == (N, C, H, W)
    max_err = float(jnp.max(jnp.abs(out - ref)))
    # slightly looser than 1e-3: the MXU f32 matmul path may differ by a few ulps more
    # than the Precision.HIGHEST XLA conv reference.
    if max_err > 2e-3:
        raise AssertionError(f"mismatch vs reference, max abs err = {max_err}")

    print("KERNEL_OK")
</pallas_src>

<mosaic_0001>
module attributes {stable_mosaic.version = 11 : i64} {
  func.func @kernel(%arg0: i32, %arg1: memref<1x4x504xf32, #tpu.memory_space<vmem>>, %arg2: memref<1x384xf32, #tpu.memory_space<vmem>>, %arg3: memref<4x100xf32, #tpu.memory_space<vmem>>, %arg4: memref<4x1xf32, #tpu.memory_space<vmem>>, %arg5: memref<4x1xf32, #tpu.memory_space<vmem>>, %arg6: memref<4x100xf32, #tpu.memory_space<vmem>>, %arg7: memref<4x1xf32, #tpu.memory_space<vmem>>, %arg8: memref<4x1xf32, #tpu.memory_space<vmem>>, %arg9: memref<1x4x384xf32, #tpu.memory_space<vmem>>, %arg10: memref<100x384xf32, #tpu.memory_space<vmem>>, %arg11: memref<4x504xf32, #tpu.memory_space<vmem>>) attributes {dimension_semantics = [#tpu.dimension_semantics<parallel>], iteration_bounds = array<i64: 2>, scalar_prefetch = 0 : i64, scratch_operands = 2 : i64, tpu.core_type = #tpu.core_type<tc>, window_params = [{transform_indices = @transform_0, window_bounds = array<i64: 1, 4, 504>}, {pipeline_mode = #tpu.pipeline_mode<synchronous>, transform_indices = @transform_1, window_bounds = array<i64: 1, 384>}, {pipeline_mode = #tpu.pipeline_mode<synchronous>, transform_indices = @transform_2, window_bounds = array<i64: 4, 100>}, {pipeline_mode = #tpu.pipeline_mode<synchronous>, transform_indices = @transform_3, window_bounds = array<i64: 4, 1>}, {pipeline_mode = #tpu.pipeline_mode<synchronous>, transform_indices = @transform_4, window_bounds = array<i64: 4, 1>}, {pipeline_mode = #tpu.pipeline_mode<synchronous>, transform_indices = @transform_5, window_bounds = array<i64: 4, 100>}, {pipeline_mode = #tpu.pipeline_mode<synchronous>, transform_indices = @transform_6, window_bounds = array<i64: 4, 1>}, {pipeline_mode = #tpu.pipeline_mode<synchronous>, transform_indices = @transform_7, window_bounds = array<i64: 4, 1>}, {transform_indices = @transform_8, window_bounds = array<i64: 1, 4, 384>}]} {
    %c0 = arith.constant 0 : index
    %c0_0 = arith.constant 0 : index
    %0 = vector.load %arg2[%c0, %c0_0] : memref<1x384xf32, #tpu.memory_space<vmem>>, vector<1x384xf32>
    %c0_1 = arith.constant 0 : index
    %c0_2 = arith.constant 0 : index
    %c0_3 = arith.constant 0 : index
    %1 = vector.load %arg1[%c0_1, %c0_2, %c0_3] : memref<1x4x504xf32, #tpu.memory_space<vmem>>, vector<1x4x384xf32>
    %2 = vector.shape_cast %1 : vector<1x4x384xf32> to vector<4x384xf32>
    %c0_4 = arith.constant 0 : index
    %c0_5 = arith.constant 0 : index
    %3 = vector.load %arg10[%c0_4, %c0_5] : memref<100x384xf32, #tpu.memory_space<vmem>>, vector<4x384xf32>
    tpu.vector_store %arg10[%c0_4, %c0_5], %2 {strides = array<i32>} : memref<100x384xf32, #tpu.memory_space<vmem>>, vector<4x384xf32>,
    %c0_6 = arith.constant 0 : index
    %c0_7 = arith.constant 0 : index
    %c1 = arith.constant 1 : index
    %4 = vector.load %arg1[%c0_6, %c0_7, %c1] : memref<1x4x504xf32, #tpu.memory_space<vmem>>, vector<1x4x384xf32>
    %5 = vector.shape_cast %4 : vector<1x4x384xf32> to vector<4x384xf32>
    %c4 = arith.constant 4 : index
    %c0_8 = arith.constant 0 : index
    %6 = vector.load %arg10[%c4, %c0_8] : memref<100x384xf32, #tpu.memory_space<vmem>>, vector<4x384xf32>
    tpu.vector_store %arg10[%c4, %c0_8], %5 {strides = array<i32>} : memref<100x384xf32, #tpu.memory_space<vmem>>, vector<4x384xf32>,
    %c0_9 = arith.constant 0 : index
    %c0_10 = arith.constant 0 : index
    %c2 = arith.constant 2 : index
    %7 = vector.load %arg1[%c0_9, %c0_10, %c2] : memref<1x4x504xf32, #tpu.memory_space<vmem>>, vector<1x4x384xf32>
    %8 = vector.shape_cast %7 : vector<1x4x384xf32> to vector<4x384xf32>
    %c8 = arith.constant 8 : index
    %c0_11 = arith.constant 0 : index
    %9 = vector.load %arg10[%c8, %c0_11] : memref<100x384xf32, #tpu.memory_space<vmem>>, vector<4x384xf32>
    tpu.vector_store %arg10[%c8, %c0_11], %8 {strides = array<i32>} : memref<100x384xf32, #tpu.memory_space<vmem>>, vector<4x384xf32>,
    %c0_12 = arith.constant 0 : index
    %c0_13 = arith.constant 0 : index
    %c3 = arith.constant 3 : index
    %10 = vector.load %arg1[%c0_12, %c0_13, %c3] : memref<1x4x504xf32, #tpu.memory_space<vmem>>, vector<1x4x384xf32>
    %11 = vector.shape_cast %10 : vector<1x4x384xf32> to vector<4x384xf32>
    %c12 = arith.constant 12 : index
    %c0_14 = arith.constant 0 : index
    %12 = vector.load %arg10[%c12, %c0_14] : memref<100x384xf32, #tpu.memory_space<vmem>>, vector<4x384xf32>
    tpu.vector_store %arg10[%c12, %c0_14], %11 {strides = array<i32>} : memref<100x384xf32, #tpu.memory_space<vmem>>, vector<4x384xf32>,
    %c0_15 = arith.constant 0 : index
    %c0_16 = arith.constant 0 : index
    %c4_17 = arith.constant 4 : index
    %13 = vector.load %arg1[%c0_15, %c0_16, %c4_17] : memref<1x4x504xf32, #tpu.memory_space<vmem>>, vector<1x4x384xf32>
    %14 = vector.shape_cast %13 : vector<1x4x384xf32> to vector<4x384xf32>
    %c16 = arith.constant 16 : index
    %c0_18 = arith.constant 0 : index
    %15 = vector.load %arg10[%c16, %c0_18] : memref<100x384xf32, #tpu.memory_space<vmem>>, vector<4x384xf32>
    tpu.vector_store %arg10[%c16, %c0_18], %14 {strides = array<i32>} : memref<100x384xf32, #tpu.memory_space<vmem>>, vector<4x384xf32>,
    %c0_19 = arith.constant 0 : index
    %c0_20 = arith.constant 0 : index
    %c24 = arith.constant 24 : index
    %16 = vector.load %arg1[%c0_19, %c0_20, %c24] : memref<1x4x504xf32, #tpu.memory_space<vmem>>, vector<1x4x384xf32>
    %17 = vector.shape_cast %16 : vector<1x4x384xf32> to vector<4x384xf32>
    %c20 = arith.constant 20 : index
    %c0_21 = arith.constant 0 : index
    %18 = vector.load %arg10[%c20, %c0_21] : memref<100x384xf32, #tpu.memory_space<vmem>>, vector<4x384xf32>
    tpu.vector_store %arg10[%c20, %c0_21], %17 {strides = array<i32>} : memref<100x384xf32, #tpu.memory_space<vmem>>, vector<4x384xf32>,
    %c0_22 = arith.constant 0 : index
    %c0_23 = arith.constant 0 : index
    %c25 = arith.constant 25 : index
    %19 = vector.load %arg1[%c0_22, %c0_23, %c25] : memref<1x4x504xf32, #tpu.memory_space<vmem>>, vector<1x4x384xf32>
    %20 = vector.shape_cast %19 : vector<1x4x384xf32> to vector<4x384xf32>
    %c24_24 = arith.constant 24 : index
    %c0_25 = arith.constant 0 : index
    %21 = vector.load %arg10[%c24_24, %c0_25] : memref<100x384xf32, #tpu.memory_space<vmem>>, vector<4x384xf32>
    tpu.vector_store %arg10[%c24_24, %c0_25], %20 {strides = array<i32>} : memref<100x384xf32, #tpu.memory_space<vmem>>, vector<4x384xf32>,
    %c0_26 = arith.constant 0 : index
    %c0_27 = arith.constant 0 : index
    %c26 = arith.constant 26 : index
    %22 = vector.load %arg1[%c0_26, %c0_27, %c26] : memref<1x4x504xf32, #tpu.memory_space<vmem>>, vector<1x4x384xf32>
    %23 = vector.shape_cast %22 : vector<1x4x384xf32> to vector<4x384xf32>
    %c28 = arith.constant 28 : index
    %c0_28 = arith.constant 0 : index
    %24 = vector.load %arg10[%c28, %c0_28] : memref<100x384xf32, #tpu.memory_space<vmem>>, vector<4x384xf32>
    tpu.vector_store %arg10[%c28, %c0_28], %23 {strides = array<i32>} : memref<100x384xf32, #tpu.memory_space<vmem>>, vector<4x384xf32>,
    %c0_29 = arith.constant 0 : index
    %c0_30 = arith.constant 0 : index
    %c27 = arith.constant 27 : index
    %25 = vector.load %arg1[%c0_29, %c0_30, %c27] : memref<1x4x504xf32, #tpu.memory_space<vmem>>, vector<1x4x384xf32>
    %26 = vector.shape_cast %25 : vector<1x4x384xf32> to vector<4x384xf32>
    %c32 = arith.constant 32 : index
    %c0_31 = arith.constant 0 : index
    %27 = vector.load %arg10[%c32, %c0_31] : memref<100x384xf32, #tpu.memory_space<vmem>>, vector<4x384xf32>
    tpu.vector_store %arg10[%c32, %c0_31], %26 {strides = array<i32>} : memref<100x384xf32, #tpu.memory_space<vmem>>, vector<4x384xf32>,
    %c0_32 = arith.constant 0 : index
    %c0_33 = arith.constant 0 : index
    %c28_34 = arith.constant 28 : index
    %28 = vector.load %arg1[%c0_32, %c0_33, %c28_34] : memref<1x4x504xf32, #tpu.memory_space<vmem>>, vector<1x4x384xf32>
    %29 = vector.shape_cast %28 : vector<1x4x384xf32> to vector<4x384xf32>
    %c36 = arith.constant 36 : index
    %c0_35 = arith.constant 0 : index
    %30 = vector.load %arg10[%c36, %c0_35] : memref<100x384xf32, #tpu.memory_space<vmem>>, vector<4x384xf32>
    tpu.vector_store %arg10[%c36, %c0_35], %29 {strides = array<i32>} : memref<100x384xf32, #tpu.memory_space<vmem>>, vector<4x384xf32>,
    %c0_36 = arith.constant 0 : index
    %c0_37 = arith.constant 0 : index
    %c48 = arith.constant 48 : index
    %31 = vector.load %arg1[%c0_36, %c0_37, %c48] : memref<1x4x504xf32, #tpu.memory_space<vmem>>, vector<1x4x384xf32>
    %32 = vector.shape_cast %31 : vector<1x4x384xf32> to vector<4x384xf32>
    %c40 = arith.constant 40 : index
    %c0_38 = arith.constant 0 : index
    %33 = vector.load %arg10[%c40, %c0_38] : memref<100x384xf32, #tpu.memory_space<vmem>>, vector<4x384xf32>
    tpu.vector_store %arg10[%c40, %c0_38], %32 {strides = array<i32>} : memref<100x384xf32, #tpu.memory_space<vmem>>, vector<4x384xf32>,
    %c0_39 = arith.constant 0 : index
    %c0_40 = arith.constant 0 : index
    %c49 = arith.constant 49 : index
    %34 = vector.load %arg1[%c0_39, %c0_40, %c49] : memref<1x4x504xf32, #tpu.memory_space<vmem>>, vector<1x4x384xf32>
    %35 = vector.shape_cast %34 : vector<1x4x384xf32> to vector<4x384xf32>
    %c44 = arith.constant 44 : index
    %c0_41 = arith.constant 0 : index
    %36 = vector.load %arg10[%c44, %c0_41] : memref<100x384xf32, #tpu.memory_space<vmem>>, vector<4x384xf32>
    tpu.vector_store %arg10[%c44, %c0_41], %35 {strides = array<i32>} : memref<100x384xf32, #tpu.memory_space<vmem>>, vector<4x384xf32>,
    %c0_42 = arith.constant 0 : index
    %c0_43 = arith.constant 0 : index
    %c50 = arith.constant 50 : index
    %37 = vector.load %arg1[%c0_42, %c0_43, %c50] : memref<1x4x504xf32, #tpu.memory_space<vmem>>, vector<1x4x384xf32>
    %38 = vector.shape_cast %37 : vector<1x4x384xf32> to vector<4x384xf32>
    %c48_44 = arith.constant 48 : index
    %c0_45 = arith.constant 0 : index
    %39 = vector.load %arg10[%c48_44, %c0_45] : memref<100x384xf32, #tpu.memory_space<vmem>>, vector<4x384xf32>
    tpu.vector_store %arg10[%c48_44, %c0_45], %38 {strides = array<i32>} : memref<100x384xf32, #tpu.memory_space<vmem>>, vector<4x384xf32>,
    %c0_46 = arith.constant 0 : index
    %c0_47 = arith.constant 0 : index
    %c51 = arith.constant 51 : index
    %40 = vector.load %arg1[%c0_46, %c0_47, %c51] : memref<1x4x504xf32, #tpu.memory_space<vmem>>, vector<1x4x384xf32>
    %41 = vector.shape_cast %40 : vector<1x4x384xf32> to vector<4x384xf32>
    %c52 = arith.constant 52 : index
    %c0_48 = arith.constant 0 : index
    %42 = vector.load %arg10[%c52, %c0_48] : memref<100x384xf32, #tpu.memory_space<vmem>>, vector<4x384xf32>
    tpu.vector_store %arg10[%c52, %c0_48], %41 {strides = array<i32>} : memref<100x384xf32, #tpu.memory_space<vmem>>, vector<4x384xf32>,
    %c0_49 = arith.constant 0 : index
    %c0_50 = arith.constant 0 : index
    %c52_51 = arith.constant 52 : index
    %43 = vector.load %arg1[%c0_49, %c0_50, %c52_51] : memref<1x4x504xf32, #tpu.memory_space<vmem>>, vector<1x4x384xf32>
    %44 = vector.shape_cast %43 : vector<1x4x384xf32> to vector<4x384xf32>
    %c56 = arith.constant 56 : index
    %c0_52 = arith.constant 0 : index
    %45 = vector.load %arg10[%c56, %c0_52] : memref<100x384xf32, #tpu.memory_space<vmem>>, vector<4x384xf32>
    tpu.vector_store %arg10[%c56, %c0_52], %44 {strides = array<i32>} : memref<100x384xf32, #tpu.memory_space<vmem>>, vector<4x384xf32>,
    %c0_53 = arith.constant 0 : index
    %c0_54 = arith.constant 0 : index
    %c72 = arith.constant 72 : index
    %46 = vector.load %arg1[%c0_53, %c0_54, %c72] : memref<1x4x504xf32, #tpu.memory_space<vmem>>, vector<1x4x384xf32>
    %47 = vector.shape_cast %46 : vector<1x4x384xf32> to vector<4x384xf32>
    %c60 = arith.constant 60 : index
    %c0_55 = arith.constant 0 : index
    %48 = vector.load %arg10[%c60, %c0_55] : memref<100x384xf32, #tpu.memory_space<vmem>>, vector<4x384xf32>
    tpu.vector_store %arg10[%c60, %c0_55], %47 {strides = array<i32>} : memref<100x384xf32, #tpu.memory_space<vmem>>, vector<4x384xf32>,
    %c0_56 = arith.constant 0 : index
    %c0_57 = arith.constant 0 : index
    %c73 = arith.constant 73 : index
    %49 = vector.load %arg1[%c0_56, %c0_57, %c73] : memref<1x4x504xf32, #tpu.memory_space<vmem>>, vector<1x4x384xf32>
    %50 = vector.shape_cast %49 : vector<1x4x384xf32> to vector<4x384xf32>
    %c64 = arith.constant 64 : index
    %c0_58 = arith.constant 0 : index
    %51 = vector.load %arg10[%c64, %c0_58] : memref<100x384xf32, #tpu.memory_space<vmem>>, vector<4x384xf32>
    tpu.vector_store %arg10[%c64, %c0_58], %50 {strides = array<i32>} : memref<100x384xf32, #tpu.memory_space<vmem>>, vector<4x384xf32>,
    %c0_59 = arith.constant 0 : index
    %c0_60 = arith.constant 0 : index
    %c74 = arith.constant 74 : index
    %52 = vector.load %arg1[%c0_59, %c0_60, %c74] : memref<1x4x504xf32, #tpu.memory_space<vmem>>, vector<1x4x384xf32>
    %53 = vector.shape_cast %52 : vector<1x4x384xf32> to vector<4x384xf32>
    %c68 = arith.constant 68 : index
    %c0_61 = arith.constant 0 : index
    %54 = vector.load %arg10[%c68, %c0_61] : memref<100x384xf32, #tpu.memory_space<vmem>>, vector<4x384xf32>
    tpu.vector_store %arg10[%c68, %c0_61], %53 {strides = array<i32>} : memref<100x384xf32, #tpu.memory_space<vmem>>, vector<4x384xf32>,
    %c0_62 = arith.constant 0 : index
    %c0_63 = arith.constant 0 : index
    %c75 = arith.constant 75 : index
    %55 = vector.load %arg1[%c0_62, %c0_63, %c75] : memref<1x4x504xf32, #tpu.memory_space<vmem>>, vector<1x4x384xf32>
    %56 = vector.shape_cast %55 : vector<1x4x384xf32> to vector<4x384xf32>
    %c72_64 = arith.constant 72 : index
    %c0_65 = arith.constant 0 : index
    %57 = vector.load %arg10[%c72_64, %c0_65] : memref<100x384xf32, #tpu.memory_space<vmem>>, vector<4x384xf32>
    tpu.vector_store %arg10[%c72_64, %c0_65], %56 {strides = array<i32>} : memref<100x384xf32, #tpu.memory_space<vmem>>, vector<4x384xf32>,
    %c0_66 = arith.constant 0 : index
    %c0_67 = arith.constant 0 : index
    %c76 = arith.constant 76 : index
    %58 = vector.load %arg1[%c0_66, %c0_67, %c76] : memref<1x4x504xf32, #tpu.memory_space<vmem>>, vector<1x4x384xf32>
    %59 = vector.shape_cast %58 : vector<1x4x384xf32> to vector<4x384xf32>
    %c76_68 = arith.constant 76 : index
    %c0_69 = arith.constant 0 : index
    %60 = vector.load %arg10[%c76_68, %c0_69] : memref<100x384xf32, #tpu.memory_space<vmem>>, vector<4x384xf32>
    tpu.vector_store %arg10[%c76_68, %c0_69], %59 {strides = array<i32>} : memref<100x384xf32, #tpu.memory_space<vmem>>, vector<4x384xf32>,
    %c0_70 = arith.constant 0 : index
    %c0_71 = arith.constant 0 : index
    %c96 = arith.constant 96 : index
    %61 = vector.load %arg1[%c0_70, %c0_71, %c96] : memref<1x4x504xf32, #tpu.memory_space<vmem>>, vector<1x4x384xf32>
    %62 = vector.shape_cast %61 : vector<1x4x384xf32> to vector<4x384xf32>
    %c80 = arith.constant 80 : index
    %c0_72 = arith.constant 0 : index
    %63 = vector.load %arg10[%c80, %c0_72] : memref<100x384xf32, #tpu.memory_space<vmem>>, vector<4x384xf32>
    tpu.vector_store %arg10[%c80, %c0_72], %62 {strides = array<i32>} : memref<100x384xf32, #tpu.memory_space<vmem>>, vector<4x384xf32>,
    %c0_73 = arith.constant 0 : index
    %c0_74 = arith.constant 0 : index
    %c97 = arith.constant 97 : index
    %64 = vector.load %arg1[%c0_73, %c0_74, %c97] : memref<1x4x504xf32, #tpu.memory_space<vmem>>, vector<1x4x384xf32>
    %65 = vector.shape_cast %64 : vector<1x4x384xf32> to vector<4x384xf32>
    %c84 = arith.constant 84 : index
    %c0_75 = arith.constant 0 : index
    %66 = vector.load %arg10[%c84, %c0_75] : memref<100x384xf32, #tpu.memory_space<vmem>>, vector<4x384xf32>
    tpu.vector_store %arg10[%c84, %c0_75], %65 {strides = array<i32>} : memref<100x384xf32, #tpu.memory_space<vmem>>, vector<4x384xf32>,
    %c0_76 = arith.constant 0 : index
    %c0_77 = arith.constant 0 : index
    %c98 = arith.constant 98 : index
    %67 = vector.load %arg1[%c0_76, %c0_77, %c98] : memref<1x4x504xf32, #tpu.memory_space<vmem>>, vector<1x4x384xf32>
    %68 = vector.shape_cast %67 : vector<1x4x384xf32> to vector<4x384xf32>
    %c88 = arith.constant 88 : index
    %c0_78 = arith.constant 0 : index
    %69 = vector.load %arg10[%c88, %c0_78] : memref<100x384xf32, #tpu.memory_space<vmem>>, vector<4x384xf32>
    tpu.vector_store %arg10[%c88, %c0_78], %68 {strides = array<i32>} : memref<100x384xf32, #tpu.memory_space<vmem>>, vector<4x384xf32>,
    %c0_79 = arith.constant 0 : index
    %c0_80 = arith.constant 0 : index
    %c99 = arith.constant 99 : index
    %70 = vector.load %arg1[%c0_79, %c0_80, %c99] : memref<1x4x504xf32, #tpu.memory_space<vmem>>, vector<1x4x384xf32>
    %71 = vector.shape_cast %70 : vector<1x4x384xf32> to vector<4x384xf32>
    %c92 = arith.constant 92 : index
    %c0_81 = arith.constant 0 : index
    %72 = vector.load %arg10[%c92, %c0_81] : memref<100x384xf32, #tpu.memory_space<vmem>>, vector<4x384xf32>
    tpu.vector_store %arg10[%c92, %c0_81], %71 {strides = array<i32>} : memref<100x384xf32, #tpu.memory_space<vmem>>, vector<4x384xf32>,
    %c0_82 = arith.constant 0 : index
    %c0_83 = arith.constant 0 : index
    %c100 = arith.constant 100 : index
    %73 = vector.load %arg1[%c0_82, %c0_83, %c100] : memref<1x4x504xf32, #tpu.memory_space<vmem>>, vector<1x4x384xf32>
    %74 = vector.shape_cast %73 : vector<1x4x384xf32> to vector<4x384xf32>
    %c96_84 = arith.constant 96 : index
    %c0_85 = arith.constant 0 : index
    %75 = vector.load %arg10[%c96_84, %c0_85] : memref<100x384xf32, #tpu.memory_space<vmem>>, vector<4x384xf32>
    tpu.vector_store %arg10[%c96_84, %c0_85], %74 {strides = array<i32>} : memref<100x384xf32, #tpu.memory_space<vmem>>, vector<4x384xf32>,
    %c0_86 = arith.constant 0 : index
    %c0_87 = arith.constant 0 : index
    %76 = vector.load %arg3[%c0_86, %c0_87] : memref<4x100xf32, #tpu.memory_space<vmem>>, vector<4x100xf32>
    %c0_88 = arith.constant 0 : index
    %c0_89 = arith.constant 0 : index
    %77 = vector.load %arg10[%c0_88, %c0_89] : memref<100x384xf32, #tpu.memory_space<vmem>>, vector<100x384xf32>
    %cst = arith.constant dense<0.000000e+00> : vector<4x384xf32>
    %78 = tpu.matmul %76, %77, %cst {dimension_numbers = #tpu.dot_dimension_numbers<[1], [0], [0], [1], [0, 0, 1, 1], [], []>} : vector<4x100xf32>, vector<100x384xf32>, vector<4x384xf32> -> vector<4x384xf32>
    %79 = vector.broadcast %0 : vector<1x384xf32> to vector<4x384xf32>
    %80 = arith.mulf %78, %79 : vector<4x384xf32>
    %cst_90 = arith.constant dense<0.000000e+00> : vector<4xf32>
    %81 = vector.multi_reduction <add>, %80, %cst_90 [1] : vector<4x384xf32> to vector<4xf32>
    %82 = vector.shape_cast %81 : vector<4xf32> to vector<4x1xf32>
    %83 = arith.mulf %80, %78 : vector<4x384xf32>
    %cst_91 = arith.constant dense<0.000000e+00> : vector<4xf32>
    %84 = vector.multi_reduction <add>, %83, %cst_91 [1] : vector<4x384xf32> to vector<4xf32>
    %85 = vector.shape_cast %84 : vector<4xf32> to vector<4x1xf32>
    %cst_92 = arith.constant 3.906250e-03 : f32
    %86 = vector.broadcast %cst_92 : f32 to vector<4x1xf32>
    %87 = arith.mulf %82, %86 : vector<4x1xf32>
    %cst_93 = arith.constant 3.906250e-03 : f32
    %88 = vector.broadcast %cst_93 : f32 to vector<4x1xf32>
    %89 = arith.mulf %85, %88 : vector<4x1xf32>
    %90 = arith.mulf %87, %87 : vector<4x1xf32>
    %91 = arith.subf %89, %90 : vector<4x1xf32>
    %92 = vector.broadcast %87 : vector<4x1xf32> to vector<4x384xf32>
    %93 = arith.subf %78, %92 : vector<4x384xf32>
    %cst_94 = arith.constant 9.99999974E-6 : f32
    %94 = vector.broadcast %cst_94 : f32 to vector<4x1xf32>
    %95 = arith.addf %91, %94 : vector<4x1xf32>
    %96 = math.rsqrt %95 : vector<4x1xf32>
    %97 = vector.broadcast %96 : vector<4x1xf32> to vector<4x384xf32>
    %98 = arith.mulf %93, %97 : vector<4x384xf32>
    %c0_95 = arith.constant 0 : index
    %c0_96 = arith.constant 0 : index
    %99 = vector.load %arg4[%c0_95, %c0_96] : memref<4x1xf32, #tpu.memory_space<vmem>>, vector<4x1xf32>
    %100 = vector.broadcast %99 : vector<4x1xf32> to vector<4x384xf32>
    %101 = arith.mulf %98, %100 : vector<4x384xf32>
    %c0_97 = arith.constant 0 : index
    %c0_98 = arith.constant 0 : index
    %102 = vector.load %arg5[%c0_97, %c0_98] : memref<4x1xf32, #tpu.memory_space<vmem>>, vector<4x1xf32>
    %103 = vector.broadcast %102 : vector<4x1xf32> to vector<4x384xf32>
    %104 = arith.addf %101, %103 : vector<4x384xf32>
    %cst_99 = arith.constant 0.000000e+00 : f32
    %105 = vector.broadcast %cst_99 : f32 to vector<4x384xf32>
    %106 = arith.maximumf %104, %105 : vector<4x384xf32>
    %107 = vector.broadcast %0 : vector<1x384xf32> to vector<4x384xf32>
    %108 = arith.mulf %106, %107 : vector<4x384xf32>
    %cst_100 = arith.constant 0.000000e+00 : f32
    %109 = vector.broadcast %cst_100 : f32 to vector<4x50xf32>
    %c0_101 = arith.constant 0 : index
    %c0_102 = arith.constant 0 : index
    %110 = vector.load %arg11[%c0_101, %c0_102] : memref<4x504xf32, #tpu.memory_space<vmem>>, vector<4x50xf32>
    tpu.vector_store %arg11[%c0_101, %c0_102], %109 {strides = array<i32>} : memref<4x504xf32, #tpu.memory_space<vmem>>, vector<4x50xf32>,
    %cst_103 = arith.constant 0.000000e+00 : f32
    %111 = vector.broadcast %cst_103 : f32 to vector<4x70xf32>
    %c0_104 = arith.constant 0 : index
    %c434 = arith.constant 434 : index
    %112 = vector.load %arg11[%c0_104, %c434] : memref<4x504xf32, #tpu.memory_space<vmem>>, vector<4x70xf32>
    tpu.vector_store %arg11[%c0_104, %c434], %111 {strides = array<i32>} : memref<4x504xf32, #tpu.memory_space<vmem>>, vector<4x70xf32>,
    %c0_105 = arith.constant 0 : index
    %c50_106 = arith.constant 50 : index
    %113 = vector.load %arg11[%c0_105, %c50_106] : memref<4x504xf32, #tpu.memory_space<vmem>>, vector<4x384xf32>
    tpu.vector_store %arg11[%c0_105, %c50_106], %108 {strides = array<i32>} : memref<4x504xf32, #tpu.memory_space<vmem>>, vector<4x384xf32>,
    %c0_107 = arith.constant 0 : index
    %c0_108 = arith.constant 0 : index
    %114 = vector.load %arg11[%c0_107, %c0_108] : memref<4x504xf32, #tpu.memory_space<vmem>>, vector<4x384xf32>
    %c0_109 = arith.constant 0 : index
    %c0_110 = arith.constant 0 : index
    %115 = vector.load %arg10[%c0_109, %c0_110] : memref<100x384xf32, #tpu.memory_space<vmem>>, vector<4x384xf32>
    tpu.vector_store %arg10[%c0_109, %c0_110], %114 {strides = array<i32>} : memref<100x384xf32, #tpu.memory_space<vmem>>, vector<4x384xf32>,
    %c0_111 = arith.constant 0 : index
    %c1_112 = arith.constant 1 : index
    %116 = vector.load %arg11[%c0_111, %c1_112] : memref<4x504xf32, #tpu.memory_space<vmem>>, vector<4x384xf32>
    %c4_113 = arith.constant 4 : index
    %c0_114 = arith.constant 0 : index
    %117 = vector.load %arg10[%c4_113, %c0_114] : memref<100x384xf32, #tpu.memory_space<vmem>>, vector<4x384xf32>
    tpu.vector_store %arg10[%c4_113, %c0_114], %116 {strides = array<i32>} : memref<100x384xf32, #tpu.memory_space<vmem>>, vector<4x384xf32>,
    %c0_115 = arith.constant 0 : index
    %c2_116 = arith.constant 2 : index
    %118 = vector.load %arg11[%c0_115, %c2_116] : memref<4x504xf32, #tpu.memory_space<vmem>>, vector<4x384xf32>
    %c8_117 = arith.constant 8 : index
    %c0_118 = arith.constant 0 : index
    %119 = vector.load %arg10[%c8_117, %c0_118] : memref<100x384xf32, #tpu.memory_space<vmem>>, vector<4x384xf32>
    tpu.vector_store %arg10[%c8_117, %c0_118], %118 {strides = array<i32>} : memref<100x384xf32, #tpu.memory_space<vmem>>, vector<4x384xf32>,
    %c0_119 = arith.constant 0 : index
    %c3_120 = arith.constant 3 : index
    %120 = vector.load %arg11[%c0_119, %c3_120] : memref<4x504xf32, #tpu.memory_space<vmem>>, vector<4x384xf32>
    %c12_121 = arith.constant 12 : index
    %c0_122 = arith.constant 0 : index
    %121 = vector.load %arg10[%c12_121, %c0_122] : memref<100x384xf32, #tpu.memory_space<vmem>>, vector<4x384xf32>
    tpu.vector_store %arg10[%c12_121, %c0_122], %120 {strides = array<i32>} : memref<100x384xf32, #tpu.memory_space<vmem>>, vector<4x384xf32>,
    %c0_123 = arith.constant 0 : index
    %c4_124 = arith.constant 4 : index
    %122 = vector.load %arg11[%c0_123, %c4_124] : memref<4x504xf32, #tpu.memory_space<vmem>>, vector<4x384xf32>
    %c16_125 = arith.constant 16 : index
    %c0_126 = arith.constant 0 : index
    %123 = vector.load %arg10[%c16_125, %c0_126] : memref<100x384xf32, #tpu.memory_space<vmem>>, vector<4x384xf32>
    tpu.vector_store %arg10[%c16_125, %c0_126], %122 {strides = array<i32>} : memref<100x384xf32, #tpu.memory_space<vmem>>, vector<4x384xf32>,
    %c0_127 = arith.constant 0 : index
    %c24_128 = arith.constant 24 : index
    %124 = vector.load %arg11[%c0_127, %c24_128] : memref<4x504xf32, #tpu.memory_space<vmem>>, vector<4x384xf32>
    %c20_129 = arith.constant 20 : index
    %c0_130 = arith.constant 0 : index
    %125 = vector.load %arg10[%c20_129, %c0_130] : memref<100x384xf32, #tpu.memory_space<vmem>>, vector<4x384xf32>
    tpu.vector_store %arg10[%c20_129, %c0_130], %124 {strides = array<i32>} : memref<100x384xf32, #tpu.memory_space<vmem>>, vector<4x384xf32>,
    %c0_131 = arith.constant 0 : index
    %c25_132 = arith.constant 25 : index
    %126 = vector.load %arg11[%c0_131, %c25_132] : memref<4x504xf32, #tpu.memory_space<vmem>>, vector<4x384xf32>
    %c24_133 = arith.constant 24 : index
    %c0_134 = arith.constant 0 : index
    %127 = vector.load %arg10[%c24_133, %c0_134] : memref<100x384xf32, #tpu.memory_space<vmem>>, vector<4x384xf32>
    tpu.vector_store %arg10[%c24_133, %c0_134], %126 {strides = array<i32>} : memref<100x384xf32, #tpu.memory_space<vmem>>, vector<4x384xf32>,
    %c0_135 = arith.constant 0 : index
    %c26_136 = arith.constant 26 : index
    %128 = vector.load %arg11[%c0_135, %c26_136] : memref<4x504xf32, #tpu.memory_space<vmem>>, vector<4x384xf32>
    %c28_137 = arith.constant 28 : index
    %c0_138 = arith.constant 0 : index
    %129 = vector.load %arg10[%c28_137, %c0_138] : memref<100x384xf32, #tpu.memory_space<vmem>>, vector<4x384xf32>
    tpu.vector_store %arg10[%c28_137, %c0_138], %128 {strides = array<i32>} : memref<100x384xf32, #tpu.memory_space<vmem>>, vector<4x384xf32>,
    %c0_139 = arith.constant 0 : index
    %c27_140 = arith.constant 27 : index
    %130 = vector.load %arg11[%c0_139, %c27_140] : memref<4x504xf32, #tpu.memory_space<vmem>>, vector<4x384xf32>
    %c32_141 = arith.constant 32 : index
    %c0_142 = arith.constant 0 : index
    %131 = vector.load %arg10[%c32_141, %c0_142] : memref<100x384xf32, #tpu.memory_space<vmem>>, vector<4x384xf32>
    tpu.vector_store %arg10[%c32_141, %c0_142], %130 {strides = array<i32>} : memref<100x384xf32, #tpu.memory_space<vmem>>, vector<4x384xf32>,
    %c0_143 = arith.constant 0 : index
    %c28_144 = arith.constant 28 : index
    %132 = vector.load %arg11[%c0_143, %c28_144] : memref<4x504xf32, #tpu.memory_space<vmem>>, vector<4x384xf32>
    %c36_145 = arith.constant 36 : index
    %c0_146 = arith.constant 0 : index
    %133 = vector.load %arg10[%c36_145, %c0_146] : memref<100x384xf32, #tpu.memory_space<vmem>>, vector<4x384xf32>
    tpu.vector_store %arg10[%c36_145, %c0_146], %132 {strides = array<i32>} : memref<100x384xf32, #tpu.memory_space<vmem>>, vector<4x384xf32>,
    %c0_147 = arith.constant 0 : index
    %c48_148 = arith.constant 48 : index
    %134 = vector.load %arg11[%c0_147, %c48_148] : memref<4x504xf32, #tpu.memory_space<vmem>>, vector<4x384xf32>
    %c40_149 = arith.constant 40 : index
    %c0_150 = arith.constant 0 : index
    %135 = vector.load %arg10[%c40_149, %c0_150] : memref<100x384xf32, #tpu.memory_space<vmem>>, vector<4x384xf32>
    tpu.vector_store %arg10[%c40_149, %c0_150], %134 {strides = array<i32>} : memref<100x384xf32, #tpu.memory_space<vmem>>, vector<4x384xf32>,
    %c0_151 = arith.constant 0 : index
    %c49_152 = arith.constant 49 : index
    %136 = vector.load %arg11[%c0_151, %c49_152] : memref<4x504xf32, #tpu.memory_space<vmem>>, vector<4x384xf32>
    %c44_153 = arith.constant 44 : index
    %c0_154 = arith.constant 0 : index
    %137 = vector.load %arg10[%c44_153, %c0_154] : memref<100x384xf32, #tpu.memory_space<vmem>>, vector<4x384xf32>
    tpu.vector_store %arg10[%c44_153, %c0_154], %136 {strides = array<i32>} : memref<100x384xf32, #tpu.memory_space<vmem>>, vector<4x384xf32>,
    %c0_155 = arith.constant 0 : index
    %c50_156 = arith.constant 50 : index
    %138 = vector.load %arg11[%c0_155, %c50_156] : memref<4x504xf32, #tpu.memory_space<vmem>>, vector<4x384xf32>
    %c48_157 = arith.constant 48 : index
    %c0_158 = arith.constant 0 : index
    %139 = vector.load %arg10[%c48_157, %c0_158] : memref<100x384xf32, #tpu.memory_space<vmem>>, vector<4x384xf32>
    tpu.vector_store %arg10[%c48_157, %c0_158], %138 {strides = array<i32>} : memref<100x384xf32, #tpu.memory_space<vmem>>, vector<4x384xf32>,
    %c0_159 = arith.constant 0 : index
    %c51_160 = arith.constant 51 : index
    %140 = vector.load %arg11[%c0_159, %c51_160] : memref<4x504xf32, #tpu.memory_space<vmem>>, vector<4x384xf32>
    %c52_161 = arith.constant 52 : index
    %c0_162 = arith.constant 0 : index
    %141 = vector.load %arg10[%c52_161, %c0_162] : memref<100x384xf32, #tpu.memory_space<vmem>>, vector<4x384xf32>
    tpu.vector_store %arg10[%c52_161, %c0_162], %140 {strides = array<i32>} : memref<100x384xf32, #tpu.memory_space<vmem>>, vector<4x384xf32>,
    %c0_163 = arith.constant 0 : index
    %c52_164 = arith.constant 52 : index
    %142 = vector.load %arg11[%c0_163, %c52_164] : memref<4x504xf32, #tpu.memory_space<vmem>>, vector<4x384xf32>
    %c56_165 = arith.constant 56 : index
    %c0_166 = arith.constant 0 : index
    %143 = vector.load %arg10[%c56_165, %c0_166] : memref<100x384xf32, #tpu.memory_space<vmem>>, vector<4x384xf32>
    tpu.vector_store %arg10[%c56_165, %c0_166], %142 {strides = array<i32>} : memref<100x384xf32, #tpu.memory_space<vmem>>, vector<4x384xf32>,
    %c0_167 = arith.constant 0 : index
    %c72_168 = arith.constant 72 : index
    %144 = vector.load %arg11[%c0_167, %c72_168] : memref<4x504xf32, #tpu.memory_space<vmem>>, vector<4x384xf32>
    %c60_169 = arith.constant 60 : index
    %c0_170 = arith.constant 0 : index
    %145 = vector.load %arg10[%c60_169, %c0_170] : memref<100x384xf32, #tpu.memory_space<vmem>>, vector<4x384xf32>
    tpu.vector_store %arg10[%c60_169, %c0_170], %144 {strides = array<i32>} : memref<100x384xf32, #tpu.memory_space<vmem>>, vector<4x384xf32>,
    %c0_171 = arith.constant 0 : index
    %c73_172 = arith.constant 73 : index
    %146 = vector.load %arg11[%c0_171, %c73_172] : memref<4x504xf32, #tpu.memory_space<vmem>>, vector<4x384xf32>
    %c64_173 = arith.constant 64 : index
    %c0_174 = arith.constant 0 : index
    %147 = vector.load %arg10[%c64_173, %c0_174] : memref<100x384xf32, #tpu.memory_space<vmem>>, vector<4x384xf32>
    tpu.vector_store %arg10[%c64_173, %c0_174], %146 {strides = array<i32>} : memref<100x384xf32, #tpu.memory_space<vmem>>, vector<4x384xf32>,
    %c0_175 = arith.constant 0 : index
    %c74_176 = arith.constant 74 : index
    %148 = vector.load %arg11[%c0_175, %c74_176] : memref<4x504xf32, #tpu.memory_space<vmem>>, vector<4x384xf32>
    %c68_177 = arith.constant 68 : index
    %c0_178 = arith.constant 0 : index
    %149 = vector.load %arg10[%c68_177, %c0_178] : memref<100x384xf32, #tpu.memory_space<vmem>>, vector<4x384xf32>
    tpu.vector_store %arg10[%c68_177, %c0_178], %148 {strides = array<i32>} : memref<100x384xf32, #tpu.memory_space<vmem>>, vector<4x384xf32>,
    %c0_179 = arith.constant 0 : index
    %c75_180 = arith.constant 75 : index
    %150 = vector.load %arg11[%c0_179, %c75_180] : memref<4x504xf32, #tpu.memory_space<vmem>>, vector<4x384xf32>
    %c72_181 = arith.constant 72 : index
    %c0_182 = arith.constant 0 : index
    %151 = vector.load %arg10[%c72_181, %c0_182] : memref<100x384xf32, #tpu.memory_space<vmem>>, vector<4x384xf32>
    tpu.vector_store %arg10[%c72_181, %c0_182], %150 {strides = array<i32>} : memref<100x384xf32, #tpu.memory_space<vmem>>, vector<4x384xf32>,
    %c0_183 = arith.constant 0 : index
    %c76_184 = arith.constant 76 : index
    %152 = vector.load %arg11[%c0_183, %c76_184] : memref<4x504xf32, #tpu.memory_space<vmem>>, vector<4x384xf32>
    %c76_185 = arith.constant 76 : index
    %c0_186 = arith.constant 0 : index
    %153 = vector.load %arg10[%c76_185, %c0_186] : memref<100x384xf32, #tpu.memory_space<vmem>>, vector<4x384xf32>
    tpu.vector_store %arg10[%c76_185, %c0_186], %152 {strides = array<i32>} : memref<100x384xf32, #tpu.memory_space<vmem>>, vector<4x384xf32>,
    %c0_187 = arith.constant 0 : index
    %c96_188 = arith.constant 96 : index
    %154 = vector.load %arg11[%c0_187, %c96_188] : memref<4x504xf32, #tpu.memory_space<vmem>>, vector<4x384xf32>
    %c80_189 = arith.constant 80 : index
    %c0_190 = arith.constant 0 : index
    %155 = vector.load %arg10[%c80_189, %c0_190] : memref<100x384xf32, #tpu.memory_space<vmem>>, vector<4x384xf32>
    tpu.vector_store %arg10[%c80_189, %c0_190], %154 {strides = array<i32>} : memref<100x384xf32, #tpu.memory_space<vmem>>, vector<4x384xf32>,
    %c0_191 = arith.constant 0 : index
    %c97_192 = arith.constant 97 : index
    %156 = vector.load %arg11[%c0_191, %c97_192] : memref<4x504xf32, #tpu.memory_space<vmem>>, vector<4x384xf32>
    %c84_193 = arith.constant 84 : index
    %c0_194 = arith.constant 0 : index
    %157 = vector.load %arg10[%c84_193, %c0_194] : memref<100x384xf32, #tpu.memory_space<vmem>>, vector<4x384xf32>
    tpu.vector_store %arg10[%c84_193, %c0_194], %156 {strides = array<i32>} : memref<100x384xf32, #tpu.memory_space<vmem>>, vector<4x384xf32>,
    %c0_195 = arith.constant 0 : index
    %c98_196 = arith.constant 98 : index
    %158 = vector.load %arg11[%c0_195, %c98_196] : memref<4x504xf32, #tpu.memory_space<vmem>>, vector<4x384xf32>
    %c88_197 = arith.constant 88 : index
    %c0_198 = arith.constant 0 : index
    %159 = vector.load %arg10[%c88_197, %c0_198] : memref<100x384xf32, #tpu.memory_space<vmem>>, vector<4x384xf32>
    tpu.vector_store %arg10[%c88_197, %c0_198], %158 {strides = array<i32>} : memref<100x384xf32, #tpu.memory_space<vmem>>, vector<4x384xf32>,
    %c0_199 = arith.constant 0 : index
    %c99_200 = arith.constant 99 : index
    %160 = vector.load %arg11[%c0_199, %c99_200] : memref<4x504xf32, #tpu.memory_space<vmem>>, vector<4x384xf32>
    %c92_201 = arith.constant 92 : index
    %c0_202 = arith.constant 0 : index
    %161 = vector.load %arg10[%c92_201, %c0_202] : memref<100x384xf32, #tpu.memory_space<vmem>>, vector<4x384xf32>
    tpu.vector_store %arg10[%c92_201, %c0_202], %160 {strides = array<i32>} : memref<100x384xf32, #tpu.memory_space<vmem>>, vector<4x384xf32>,
    %c0_203 = arith.constant 0 : index
    %c100_204 = arith.constant 100 : index
    %162 = vector.load %arg11[%c0_203, %c100_204] : memref<4x504xf32, #tpu.memory_space<vmem>>, vector<4x384xf32>
    %c96_205 = arith.constant 96 : index
    %c0_206 = arith.constant 0 : index
    %163 = vector.load %arg10[%c96_205, %c0_206] : memref<100x384xf32, #tpu.memory_space<vmem>>, vector<4x384xf32>
    tpu.vector_store %arg10[%c96_205, %c0_206], %162 {strides = array<i32>} : memref<100x384xf32, #tpu.memory_space<vmem>>, vector<4x384xf32>,
    %c0_207 = arith.constant 0 : index
    %c0_208 = arith.constant 0 : index
    %164 = vector.load %arg6[%c0_207, %c0_208] : memref<4x100xf32, #tpu.memory_space<vmem>>, vector<4x100xf32>
    %c0_209 = arith.constant 0 : index
    %c0_210 = arith.constant 0 : index
    %165 = vector.load %arg10[%c0_209, %c0_210] : memref<100x384xf32, #tpu.memory_space<vmem>>, vector<100x384xf32>
    %cst_211 = arith.constant dense<0.000000e+00> : vector<4x384xf32>
    %166 = tpu.matmul %164, %165, %cst_211 {dimension_numbers = #tpu.dot_dimension_numbers<[1], [0], [0], [1], [0, 0, 1, 1], [], []>} : vector<4x100xf32>, vector<100x384xf32>, vector<4x384xf32> -> vector<4x384xf32>
    %167 = vector.broadcast %0 : vector<1x384xf32> to vector<4x384xf32>
    %168 = arith.mulf %166, %167 : vector<4x384xf32>
    %cst_212 = arith.constant dense<0.000000e+00> : vector<4xf32>
    %169 = vector.multi_reduction <add>, %168, %cst_212 [1] : vector<4x384xf32> to vector<4xf32>
    %170 = vector.shape_cast %169 : vector<4xf32> to vector<4x1xf32>
    %171 = arith.mulf %168, %166 : vector<4x384xf32>
    %cst_213 = arith.constant dense<0.000000e+00> : vector<4xf32>
    %172 = vector.multi_reduction <add>, %171, %cst_213 [1] : vector<4x384xf32> to vector<4xf32>
    %173 = vector.shape_cast %172 : vector<4xf32> to vector<4x1xf32>
    %cst_214 = arith.constant 3.906250e-03 : f32
    %174 = vector.broadcast %cst_214 : f32 to vector<4x1xf32>
    %175 = arith.mulf %170, %174 : vector<4x1xf32>
    %cst_215 = arith.constant 3.906250e-03 : f32
    %176 = vector.broadcast %cst_215 : f32 to vector<4x1xf32>
    %177 = arith.mulf %173, %176 : vector<4x1xf32>
    %178 = arith.mulf %175, %175 : vector<4x1xf32>
    %179 = arith.subf %177, %178 : vector<4x1xf32>
    %180 = vector.broadcast %175 : vector<4x1xf32> to vector<4x384xf32>
    %181 = arith.subf %166, %180 : vector<4x384xf32>
    %cst_216 = arith.constant 9.99999974E-6 : f32
    %182 = vector.broadcast %cst_216 : f32 to vector<4x1xf32>
    %183 = arith.addf %179, %182 : vector<4x1xf32>
    %184 = math.rsqrt %183 : vector<4x1xf32>
    %185 = vector.broadcast %184 : vector<4x1xf32> to vector<4x384xf32>
    %186 = arith.mulf %181, %185 : vector<4x384xf32>
    %c0_217 = arith.constant 0 : index
    %c0_218 = arith.constant 0 : index
    %187 = vector.load %arg7[%c0_217, %c0_218] : memref<4x1xf32, #tpu.memory_space<vmem>>, vector<4x1xf32>
    %188 = vector.broadcast %187 : vector<4x1xf32> to vector<4x384xf32>
    %189 = arith.mulf %186, %188 : vector<4x384xf32>
    %c0_219 = arith.constant 0 : index
    %c0_220 = arith.constant 0 : index
    %190 = vector.load %arg8[%c0_219, %c0_220] : memref<4x1xf32, #tpu.memory_space<vmem>>, vector<4x1xf32>
    %191 = vector.broadcast %190 : vector<4x1xf32> to vector<4x384xf32>
    %192 = arith.addf %189, %191 : vector<4x384xf32>
    %c0_221 = arith.constant 0 : index
    %c0_222 = arith.constant 0 : index
    %c50_223 = arith.constant 50 : index
    %193 = vector.load %arg1[%c0_221, %c0_222, %c50_223] : memref<1x4x504xf32, #tpu.memory_space<vmem>>, vector<1x4x384xf32>
    %194 = vector.shape_cast %193 : vector<1x4x384xf32> to vector<4x384xf32>
    %195 = arith.addf %194, %192 : vector<4x384xf32>
    %c0_224 = arith.constant 0 : index
    %c0_225 = arith.constant 0 : index
    %c0_226 = arith.constant 0 : index
    %196 = vector.load %arg9[%c0_224, %c0_225, %c0_226] : memref<1x4x384xf32, #tpu.memory_space<vmem>>, vector<1x4x384xf32>
    %197 = vector.shape_cast %196 : vector<1x4x384xf32> to vector<4x384xf32>
    %198 = vector.shape_cast %195 : vector<4x384xf32> to vector<1x4x384xf32>
    tpu.vector_store %arg9[%c0_224, %c0_225, %c0_226], %198 {strides = array<i32>} : memref<1x4x384xf32, #tpu.memory_space<vmem>>, vector<1x4x384xf32>,
    return
  }
  func.func @transform_0(%arg0: i32) -> (i32, i32, i32) {
    %c0_i32 = arith.constant 0 : i32
    %c0_i32_0 = arith.constant 0 : i32
    %c0_i32_1 = arith.constant 0 : i32
    return %arg0, %c0_i32, %c0_i32_0 : i32, i32, i32
  }
  func.func @transform_1(%arg0: i32) -> (i32, i32) {
    %c0_i32 = arith.constant 0 : i32
    %c0_i32_0 = arith.constant 0 : i32
    %c0_i32_1 = arith.constant 0 : i32
    return %c0_i32, %c0_i32_0 : i32, i32
  }
  func.func @transform_2(%arg0: i32) -> (i32, i32) {
    %c0_i32 = arith.constant 0 : i32
    %c0_i32_0 = arith.constant 0 : i32
    %c0_i32_1 = arith.constant 0 : i32
    return %c0_i32, %c0_i32_0 : i32, i32
  }
  func.func @transform_3(%arg0: i32) -> (i32, i32) {
    %c0_i32 = arith.constant 0 : i32
    %c0_i32_0 = arith.constant 0 : i32
    %c0_i32_1 = arith.constant 0 : i32
    return %c0_i32, %c0_i32_0 : i32, i32
  }
  func.func @transform_4(%arg0: i32) -> (i32, i32) {
    %c0_i32 = arith.constant 0 : i32
    %c0_i32_0 = arith.constant 0 : i32
    %c0_i32_1 = arith.constant 0 : i32
    return %c0_i32, %c0_i32_0 : i32, i32
  }
  func.func @transform_5(%arg0: i32) -> (i32, i32) {
    %c0_i32 = arith.constant 0 : i32
    %c0_i32_0 = arith.constant 0 : i32
    %c0_i32_1 = arith.constant 0 : i32
    return %c0_i32, %c0_i32_0 : i32, i32
  }
  func.func @transform_6(%arg0: i32) -> (i32, i32) {
    %c0_i32 = arith.constant 0 : i32
    %c0_i32_0 = arith.constant 0 : i32
    %c0_i32_1 = arith.constant 0 : i32
    return %c0_i32, %c0_i32_0 : i32, i32
  }
  func.func @transform_7(%arg0: i32) -> (i32, i32) {
    %c0_i32 = arith.constant 0 : i32
    %c0_i32_0 = arith.constant 0 : i32
    %c0_i32_1 = arith.constant 0 : i32
    return %c0_i32, %c0_i32_0 : i32, i32
  }
  func.func @transform_8(%arg0: i32) -> (i32, i32, i32) {
    %c0_i32 = arith.constant 0 : i32
    %c0_i32_0 = arith.constant 0 : i32
    %c0_i32_1 = arith.constant 0 : i32
    return %arg0, %c0_i32, %c0_i32_0 : i32, i32, i32
  }
}

</mosaic_0001>

<llo_original>
// kernel: tpu_custom_call.1
$region0: #{tpu_custom_call.1}
  #allocation0 [shape = 'u32[]', space=smem, size = 0x4, offset = 0x4, fixed_abs, tag = 'smem constant byte address 0x4 - core index']
  #allocation1 [shape = 'u32[144,128]{1,0:T(1,128)}', space=vmem, size = 0x12000, scoped, tag = 'internal scratch']
  #allocation2 [shape = 'f32[100,384]{1,0:T(8,128)}', space=vmem, size = 0x27000, scoped, tag = 'scratch operand']
  #allocation3 [shape = 'f32[4,504]{1,0:T(4,128)}', space=vmem, size = 0x2000, scoped, tag = 'scratch operand']
  %s0 = inlined_call_operand.hbm [shape: f32[2,4,504], index: 0, kind: input, shape index: {}]
  %s1 = inlined_call_operand.vmem [shape: f32[1,384], index: 1, kind: input, shape index: {}]
  %s2 = inlined_call_operand.vmem [shape: f32[4,100], index: 2, kind: input, shape index: {}]
  %s3 = inlined_call_operand.vmem [shape: f32[4,1], index: 3, kind: input, shape index: {}]
  %s4 = inlined_call_operand.vmem [shape: f32[4,1], index: 4, kind: input, shape index: {}]
  %s5 = inlined_call_operand.vmem [shape: f32[4,100], index: 5, kind: input, shape index: {}]
  %s6 = inlined_call_operand.vmem [shape: f32[4,1], index: 6, kind: input, shape index: {}]
  %s7 = inlined_call_operand.vmem [shape: f32[4,1], index: 7, kind: input, shape index: {}]
  %s8 = inlined_call_operand.hbm [shape: f32[2,4,384], index: 8, kind: output, shape index: {}]
  %s9 = sld [smem:[#allocation0]]
  $region69: #{tpu_custom_call.1} parent=0
    _
  %s11 = ssub.s32 1, %s9
  %s12 = scalar_select 0, %s11, %s9
  $region1: #{tpu_custom_call.1} parent=0
    #allocation4 [shape = 'u8[16384]{0}', space=vmem, size = 0x4000, scoped, tag = 'input window, operand 0']
    #allocation5 [shape = 's32[2]{0}', space=sflag, size = 0x8, scoped, tag = 'scoped memory for tpu_custom_call.1']
    #allocation6 [shape = 's32[2]{0}', space=sflag, size = 0x8, scoped, tag = 'scoped memory for tpu_custom_call.1']
    #allocation7 [shape = 'u8[12288]{0}', space=vmem, size = 0x3000, scoped, tag = 'output window, operand 0']
    %13 = vsyncpa [#allocation5], 0
    %s14 = scalar_lea.sflag [#allocation5], 1
    %15 = vsyncpa %s14, 0
    %16 = vsyncpa [#allocation6], 0
    %s17 = scalar_lea.sflag [#allocation6], 1
    %18 = vsyncpa %s17, 0
    loop: start=0, step=1, limit=4
    $region2: #{tpu_custom_call.1} parent=1 // loop_pre_header
      _
    $region3: #{tpu_custom_call.1} parent=1 // loop_header
      %s20 = sphi 0, %s24
      %p21 = scmp.ge.s32.totalorder %s20, 4
      %s30 = sphi 0, %s32
      %s33 = sphi 0, %s30
      %s34 = sphi 0, %s33
      %s50 = sphi 0, %s34
      %s54 = sphi 0, %s54
      %s56 = sphi 0, %s54
      %s57 = sphi 0, %s56
      %s71 = sphi 0, %s57
      %s75 = sphi 0, %s75
      %s77 = sphi 0, %s75
      %s78 = sphi 0, %s77
      %s92 = sphi 0, %s78
      %s96 = sphi 0, %s96
      %s98 = sphi 0, %s96
      %s99 = sphi 0, %s98
      %s113 = sphi 0, %s99
      %s117 = sphi 0, %s117
      %s119 = sphi 0, %s117
      %s120 = sphi 0, %s119
      %s134 = sphi 0, %s120
      %s138 = sphi 0, %s138
      %s140 = sphi 0, %s138
      %s141 = sphi 0, %s140
      %s155 = sphi 0, %s141
      %s159 = sphi 0, %s159
      %s161 = sphi 0, %s159
      %s162 = sphi 0, %s161
      %s176 = sphi 0, %s162
      %s180 = sphi 0, %s180
      %s182 = sphi 0, %s180
      %s183 = sphi 0, %s182
      %s197 = sphi 0, %s183
      %s203 = sphi 0, %s205
      %s206 = sphi 0, %s203
      %s207 = sphi 0, %s206
      %s223 = sphi 0, %s207
    $region4: #{tpu_custom_call.1} parent=1 // loop_header_branch
      %23 = sbr.rel (%p21) target = $region8
    $region5: #{tpu_custom_call.1} parent=1 // loop_body
      %s25 = ssub.s32 %s20, 1
      %s26 = ssub.s32 %s20, 2
      %s27 = sadd.s32 %s20, 1
      %s28 = ssub.s32 %s20, %s27
      %p29 = scmp.eq.s32.totalorder %s28, 0
      %s31 = sadd.s32 %s30, 1
      %s32 = scalar_select %p29, %s30, %s31
      %p35 = pneg %p29
      %p36 = scmp.eq.s32.totalorder %s20, 1
      %p37 = por %p35, %p36
      %p38 = scmp.ne.s32.totalorder %s30, %s33
      %p39 = scmp.eq.s32.totalorder %s20, 0
      %p40 = por %p38, %p39
      %p41 = scmp.ne.s32.totalorder %s30, %s33
      %p42 = scmp.eq.s32.totalorder %s25, 1
      %p43 = por %p41, %p42
      %p44 = scmp.ne.s32.totalorder %s33, %s34
      %p45 = scmp.eq.s32.totalorder %s25, 0
      %p46 = por %p44, %p45
      %p47 = scmp.ne.s32.totalorder %s33, %s34
      %p48 = scmp.eq.s32.totalorder %s26, 1
      %p49 = por %p47, %p48
      %p51 = scmp.ne.s32.totalorder %s34, %s50
      %p52 = scmp.eq.s32.totalorder %s26, 0
      %p53 = por %p51, %p52
      %s55 = sadd.s32 %s54, 1
      %p58 = scmp.eq.s32.totalorder %s20, 1
      %p59 = scmp.ne.s32.totalorder %s54, %s56
      %p60 = scmp.eq.s32.totalorder %s20, 0
      %p61 = por %p59, %p60
      %p62 = scmp.ne.s32.totalorder %s54, %s56
      %p63 = scmp.eq.s32.totalorder %s25, 1
      %p64 = por %p62, %p63
      %p65 = scmp.ne.s32.totalorder %s56, %s57
      %p66 = scmp.eq.s32.totalorder %s25, 0
      %p67 = por %p65, %p66
      %p68 = scmp.ne.s32.totalorder %s56, %s57
      %p69 = scmp.eq.s32.totalorder %s26, 1
      %p70 = por %p68, %p69
      %p72 = scmp.ne.s32.totalorder %s57, %s71
      %p73 = scmp.eq.s32.totalorder %s26, 0
      %p74 = por %p72, %p73
      %s76 = sadd.s32 %s75, 1
      %p79 = scmp.eq.s32.totalorder %s20, 1
      %p80 = scmp.ne.s32.totalorder %s75, %s77
      %p81 = scmp.eq.s32.totalorder %s20, 0
      %p82 = por %p80, %p81
      %p83 = scmp.ne.s32.totalorder %s75, %s77
      %p84 = scmp.eq.s32.totalorder %s25, 1
      %p85 = por %p83, %p84
      %p86 = scmp.ne.s32.totalorder %s77, %s78
      %p87 = scmp.eq.s32.totalorder %s25, 0
      %p88 = por %p86, %p87
      %p89 = scmp.ne.s32.totalorder %s77, %s78
      %p90 = scmp.eq.s32.totalorder %s26, 1
      %p91 = por %p89, %p90
      %p93 = scmp.ne.s32.totalorder %s78, %s92
      %p94 = scmp.eq.s32.totalorder %s26, 0
      %p95 = por %p93, %p94
      %s97 = sadd.s32 %s96, 1
      %p100 = scmp.eq.s32.totalorder %s20, 1
      %p101 = scmp.ne.s32.totalorder %s96, %s98
      %p102 = scmp.eq.s32.totalorder %s20, 0
      %p103 = por %p101, %p102
      %p104 = scmp.ne.s32.totalorder %s96, %s98
      %p105 = scmp.eq.s32.totalorder %s25, 1
      %p106 = por %p104, %p105
      %p107 = scmp.ne.s32.totalorder %s98, %s99
      %p108 = scmp.eq.s32.totalorder %s25, 0
      %p109 = por %p107, %p108
      %p110 = scmp.ne.s32.totalorder %s98, %s99
      %p111 = scmp.eq.s32.totalorder %s26, 1
      %p112 = por %p110, %p111
      %p114 = scmp.ne.s32.totalorder %s99, %s113
      %p115 = scmp.eq.s32.totalorder %s26, 0
      %p116 = por %p114, %p115
      %s118 = sadd.s32 %s117, 1
      %p121 = scmp.eq.s32.totalorder %s20, 1
      %p122 = scmp.ne.s32.totalorder %s117, %s119
      %p123 = scmp.eq.s32.totalorder %s20, 0
      %p124 = por %p122, %p123
      %p125 = scmp.ne.s32.totalorder %s117, %s119
      %p126 = scmp.eq.s32.totalorder %s25, 1
      %p127 = por %p125, %p126
      %p128 = scmp.ne.s32.totalorder %s119, %s120
      %p129 = scmp.eq.s32.totalorder %s25, 0
      %p130 = por %p128, %p129
      %p131 = scmp.ne.s32.totalorder %s119, %s120
      %p132 = scmp.eq.s32.totalorder %s26, 1
      %p133 = por %p131, %p132
      %p135 = scmp.ne.s32.totalorder %s120, %s134
      %p136 = scmp.eq.s32.totalorder %s26, 0
      %p137 = por %p135, %p136
      %s139 = sadd.s32 %s138, 1
      %p142 = scmp.eq.s32.totalorder %s20, 1
      %p143 = scmp.ne.s32.totalorder %s138, %s140
      %p144 = scmp.eq.s32.totalorder %s20, 0
      %p145 = por %p143, %p144
      %p146 = scmp.ne.s32.totalorder %s138, %s140
      %p147 = scmp.eq.s32.totalorder %s25, 1
      %p148 = por %p146, %p147
      %p149 = scmp.ne.s32.totalorder %s140, %s141
      %p150 = scmp.eq.s32.totalorder %s25, 0
      %p151 = por %p149, %p150
      %p152 = scmp.ne.s32.totalorder %s140, %s141
      %p153 = scmp.eq.s32.totalorder %s26, 1
      %p154 = por %p152, %p153
      %p156 = scmp.ne.s32.totalorder %s141, %s155
      %p157 = scmp.eq.s32.totalorder %s26, 0
      %p158 = por %p156, %p157
      %s160 = sadd.s32 %s159, 1
      %p163 = scmp.eq.s32.totalorder %s20, 1
      %p164 = scmp.ne.s32.totalorder %s159, %s161
      %p165 = scmp.eq.s32.totalorder %s20, 0
      %p166 = por %p164, %p165
      %p167 = scmp.ne.s32.totalorder %s159, %s161
      %p168 = scmp.eq.s32.totalorder %s25, 1
      %p169 = por %p167, %p168
      %p170 = scmp.ne.s32.totalorder %s161, %s162
      %p171 = scmp.eq.s32.totalorder %s25, 0
      %p172 = por %p170, %p171
      %p173 = scmp.ne.s32.totalorder %s161, %s162
      %p174 = scmp.eq.s32.totalorder %s26, 1
      %p175 = por %p173, %p174
      %p177 = scmp.ne.s32.totalorder %s162, %s176
      %p178 = scmp.eq.s32.totalorder %s26, 0
      %p179 = por %p177, %p178
      %s181 = sadd.s32 %s180, 1
      %p184 = scmp.eq.s32.totalorder %s20, 1
      %p185 = scmp.ne.s32.totalorder %s180, %s182
      %p186 = scmp.eq.s32.totalorder %s20, 0
      %p187 = por %p185, %p186
      %p188 = scmp.ne.s32.totalorder %s180, %s182
      %p189 = scmp.eq.s32.totalorder %s25, 1
      %p190 = por %p188, %p189
      %p191 = scmp.ne.s32.totalorder %s182, %s183
      %p192 = scmp.eq.s32.totalorder %s25, 0
      %p193 = por %p191, %p192
      %p194 = scmp.ne.s32.totalorder %s182, %s183
      %p195 = scmp.eq.s32.totalorder %s26, 1
      %p196 = por %p194, %p195
      %p198 = scmp.ne.s32.totalorder %s183, %s197
      %p199 = scmp.eq.s32.totalorder %s26, 0
      %p200 = por %p198, %p199
      %s201 = ssub.s32 %s20, %s27
      %p202 = scmp.eq.s32.totalorder %s201, 0
      %s204 = sadd.s32 %s203, 1
      %s205 = scalar_select %p202, %s203, %s204
      %p208 = pneg %p202
      %p209 = scmp.eq.s32.totalorder %s20, 1
      %p210 = por %p208, %p209
      %p211 = scmp.ne.s32.totalorder %s203, %s206
      %p212 = scmp.eq.s32.totalorder %s20, 0
      %p213 = por %p211, %p212
      %p214 = scmp.ne.s32.totalorder %s203, %s206
      %p215 = scmp.eq.s32.totalorder %s25, 1
      %p216 = por %p214, %p215
      %p217 = scmp.ne.s32.totalorder %s206, %s207
      %p218 = scmp.eq.s32.totalorder %s25, 0
      %p219 = por %p217, %p218
      %p220 = scmp.ne.s32.totalorder %s206, %s207
      %p221 = scmp.eq.s32.totalorder %s26, 1
      %p222 = por %p220, %p221
      %p224 = scmp.ne.s32.totalorder %s207, %s223
      %p225 = scmp.eq.s32.totalorder %s26, 0
      %p226 = por %p224, %p225
      %p227 = scmp.le.s32.totalorder 1, %s20
      %p228 = scmp.lt.s32.totalorder %s20, 3
      %p229 = pnand %p227, %p228
      %p230 = pneg %p229
      // Predicated region
      $region9: #{tpu_custom_call.1} parent=5 // pred_check
        _
      $region10: #{tpu_custom_call.1} parent=5 // pred_check_branch
        %232 = sbr.rel (%p229) target = $region12
      $region11: #{tpu_custom_call.1} parent=5 // pred_region
        %s233 = ssub.s32 %s20, 1
        // Predicated region
        $region13: #{tpu_custom_call.1} parent=11 // pred_check
          %p234 = pneg %p67
        $region14: #{tpu_custom_call.1} parent=11 // pred_check_branch
          %236 = sbr.rel (%p234) target = $region16
        $region15: #{tpu_custom_call.1} parent=11 // pred_region
          _
        $region16: #{tpu_custom_call.1} parent=11 // pred_fallthru
          _
        // Predicated region
        $region17: #{tpu_custom_call.1} parent=11 // pred_check
          %p237 = pneg %p88
        $region18: #{tpu_custom_call.1} parent=11 // pred_check_branch
          %239 = sbr.rel (%p237) target = $region20
        $region19: #{tpu_custom_call.1} parent=11 // pred_region
          _
        $region20: #{tpu_custom_call.1} parent=11 // pred_fallthru
          _
        // Predicated region
        $region21: #{tpu_custom_call.1} parent=11 // pred_check
          %p240 = pneg %p109
        $region22: #{tpu_custom_call.1} parent=11 // pred_check_branch
          %242 = sbr.rel (%p240) target = $region24
        $region23: #{tpu_custom_call.1} parent=11 // pred_region
          _
        $region24: #{tpu_custom_call.1} parent=11 // pred_fallthru
          _
        // Predicated region
        $region25: #{tpu_custom_call.1} parent=11 // pred_check
          %p243 = pneg %p130
        $region26: #{tpu_custom_call.1} parent=11 // pred_check_branch
          %245 = sbr.rel (%p243) target = $region28
        $region27: #{tpu_custom_call.1} parent=11 // pred_region
          _
        $region28: #{tpu_custom_call.1} parent=11 // pred_fallthru
          _
        // Predicated region
        $region29: #{tpu_custom_call.1} parent=11 // pred_check
          %p246 = pneg %p151
        $region30: #{tpu_custom_call.1} parent=11 // pred_check_branch
          %248 = sbr.rel (%p246) target = $region32
        $region31: #{tpu_custom_call.1} parent=11 // pred_region
          _
        $region32: #{tpu_custom_call.1} parent=11 // pred_fallthru
          _
        // Predicated region
        $region33: #{tpu_custom_call.1} parent=11 // pred_check
          %p249 = pneg %p172
        $region34: #{tpu_custom_call.1} parent=11 // pred_check_branch
          %251 = sbr.rel (%p249) target = $region36
        $region35: #{tpu_custom_call.1} parent=11 // pred_region
          _
        $region36: #{tpu_custom_call.1} parent=11 // pred_fallthru
          _
        // Predicated region
        $region37: #{tpu_custom_call.1} parent=11 // pred_check
          %p252 = pneg %p193
        $region38: #{tpu_custom_call.1} parent=11 // pred_check_branch
          %254 = sbr.rel (%p252) target = $region40
        $region39: #{tpu_custom_call.1} parent=11 // pred_region
          _
        $region40: #{tpu_custom_call.1} parent=11 // pred_fallthru
          _
      $region12: #{tpu_custom_call.1} parent=5 // pred_fallthru
        _
      %p255 = scmp.lt.s32.totalorder %s20, 2
      // Predicated region
      $region41: #{tpu_custom_call.1} parent=5 // pred_check
        %p256 = pneg %p255
      $region42: #{tpu_custom_call.1} parent=5 // pred_check_branch
        %258 = sbr.rel (%p256) target = $region44
      $region43: #{tpu_custom_call.1} parent=5 // pred_region
        // Predicated region
        $region45: #{tpu_custom_call.1} parent=43 // pred_check
          %p259 = pneg %p40
        $region46: #{tpu_custom_call.1} parent=43 // pred_check_branch
          %261 = sbr.rel (%p259) target = $region48
        $region47: #{tpu_custom_call.1} parent=43 // pred_region
          %s262 = sand.u32 %s30, 1
          %s263 = scalar_lea.sflag [#allocation5], %s262
          %s264 = sand.u32 %s30, 1
          %s265 = smul.addr %s264, 16
          %s266 = scalar_lea.vmem [#allocation4], %s265
          %s268 = ssub.s32 256, 256
          %269 = vsyncadd %s263, %s268
          %s270 = smul.addr %s20, 4
          %s271 = smul.addr %s270, 64
          %s272 = scalar_lea.hbm %s0, %s271
          %s274 = sshll.u32 %s266, 4
          %s275 = int_to_ptr.vmem [resolvable:$true] %s274
          %277 = dma.hbm_to_vmem [thread:$0]  %s272, 256, %s275, %s263
        $region48: #{tpu_custom_call.1} parent=43 // pred_fallthru
          _
      $region44: #{tpu_custom_call.1} parent=5 // pred_fallthru
        _
      %p278 = scmp.le.s32.totalorder 1, %s20
      %p279 = scmp.lt.s32.totalorder %s20, 3
      %p280 = pnand %p278, %p279
      %p281 = pneg %p280
      // Predicated region
      $region49: #{tpu_custom_call.1} parent=5 // pred_check
        _
      $region50: #{tpu_custom_call.1} parent=5 // pred_check_branch
        %283 = sbr.rel (%p280) target = $region52
      $region51: #{tpu_custom_call.1} parent=5 // pred_region
        %s284 = ssub.s32 %s20, 1
        %s285 = sand.u32 %s33, 1
        %s286 = scalar_lea.sflag [#allocation5], %s285
        %s287 = sand.u32 %s33, 1
        %s288 = smul.addr %s287, 16
        %s289 = scalar_lea.vmem [#allocation4], %s288
        // Predicated region
        $region53: #{tpu_custom_call.1} parent=51 // pred_check
          %p290 = pneg %p46
        $region54: #{tpu_custom_call.1} parent=51 // pred_check_branch
          %292 = sbr.rel (%p290) target = $region56
        $region55: #{tpu_custom_call.1} parent=51 // pred_region
          %293 = dma.done %s286, 256
        $region56: #{tpu_custom_call.1} parent=51 // pred_fallthru
          _
        %s294 = sand.u32 %s33, 1
        %s295 = scalar_lea.sflag [#allocation5], %s294
        %s296 = sand.u32 %s33, 1
        %s297 = smul.addr %s296, 16
        %s298 = scalar_lea.vmem [#allocation4], %s297
        %p299 = pneg %p46
        %p300 = pneg %p43
        %p301 = pneg %p67
        %p302 = pneg %p64
        %p303 = pneg %p88
        %p304 = pneg %p85
        %p305 = pneg %p109
        %p306 = pneg %p106
        %p307 = pneg %p130
        %p308 = pneg %p127
        %p309 = pneg %p151
        %p310 = pneg %p148
        %p311 = pneg %p172
        %p312 = pneg %p169
        %p313 = pneg %p193
        %p314 = pneg %p190
        %p315 = pneg %p219
        %p316 = pneg %p216
        %s317 = sand.u32 %s206, 1
        %s318 = scalar_lea.sflag [#allocation6], %s317
        %s319 = sand.u32 %s206, 1
        %s320 = smul.addr %s319, 12
        %s321 = scalar_lea.vmem [#allocation7], %s320
        %v322 = vld [vmem:[%s1] sm:$0x7]
        %v323 = vld [vmem:[%s289] sm:$0xff]
        %v324 = vld [vmem:[%s289 + $0x8] sm:$0xf]
        %v326 = vcombine.high %v323, %v323
        %328 = vst [vmem:[#allocation2] sm:$0xf] %v323
        %329 = vst [vmem:[#allocation2 + $0x8] sm:$0xf] %v326
        %330 = vst [vmem:[#allocation2 + $0x10] sm:$0xf] %v324
        %v331 = vld [vmem:[%s289] sm:$0xff]
        %v332 = vld [vmem:[%s289 + $0x8] sm:$0xff]
        %v335 = vcombine.low %v331, %v331
        %v336 = vcombine.low %v332, %v332
        %337 = vrot.lane.b32.xlu0 %v335, 127
        %v338 = vpop.permute.xlu0 %337
        %339 = vrot.lane.b32.xlu0 %v331, 127
        %v340 = vpop.permute.xlu0 %339
        %341 = vrot.lane.b32.xlu0 %v336, 127
        %v342 = vpop.permute.xlu0 %341
        %343 = vrot.lane.b32.xlu0 %v332, 127
        %v344 = vpop.permute.xlu0 %343
        %vm345 = vcmask 1039360
        %v346 = vsel %vm345, %v338, %v340
        %v347 = vsel %vm345, %v340, %v342
        %v348 = vsel %vm345, %v342, %v344
        %352 = vst [vmem:[#allocation2] sm:$0xf0] %v346
        %353 = vst [vmem:[#allocation2 + $0x8] sm:$0xf0] %v347
        %354 = vst [vmem:[#allocation2 + $0x10] sm:$0xf0] %v348
        %v355 = vld [vmem:[%s289] sm:$0xff]
        %v356 = vld [vmem:[%s289 + $0x8] sm:$0xff]
        %v359 = vcombine.high %v355, %v355
        %v360 = vcombine.high %v356, %v356
        %361 = vrot.lane.b32.xlu0 %v355, 126
        %v362 = vpop.permute.xlu0 %361
        %363 = vrot.lane.b32.xlu0 %v359, 126
        %v364 = vpop.permute.xlu0 %363
        %365 = vrot.lane.b32.xlu0 %v356, 126
        %v366 = vpop.permute.xlu0 %365
        %367 = vrot.lane.b32.xlu0 %v360, 126
        %v368 = vpop.permute.xlu0 %367
        %vm369 = vcmask 1031168
        %v370 = vsel %vm369, %v362, %v364
        %v371 = vsel %vm369, %v364, %v366
        %v372 = vsel %vm369, %v366, %v368
        %376 = vst [vmem:[#allocation2 + $0x18] sm:$0xf] %v370
        %377 = vst [vmem:[#allocation2 + $0x20] sm:$0xf] %v371
        %378 = vst [vmem:[#allocation2 + $0x28] sm:$0xf] %v372
        %v379 = vld [vmem:[%s289] sm:$0xff]
        %v380 = vld [vmem:[%s289 + $0x8] sm:$0xff]
        %v383 = vcombine.low %v379, %v379
        %v384 = vcombine.low %v380, %v380
        %385 = vrot.lane.b32.xlu0 %v383, 125
        %v386 = vpop.permute.xlu0 %385
        %387 = vrot.lane.b32.xlu0 %v379, 125
        %v388 = vpop.permute.xlu0 %387
        %389 = vrot.lane.b32.xlu0 %v384, 125
        %v390 = vpop.permute.xlu0 %389
        %391 = vrot.lane.b32.xlu0 %v380, 125
        %v392 = vpop.permute.xlu0 %391
        %vm393 = vcmask 1022976
        %v394 = vsel %vm393, %v386, %v388
        %v395 = vsel %vm393, %v388, %v390
        %v396 = vsel %vm393, %v390, %v392
        %400 = vst [vmem:[#allocation2 + $0x18] sm:$0xf0] %v394
        %401 = vst [vmem:[#allocation2 + $0x20] sm:$0xf0] %v395
        %402 = vst [vmem:[#allocation2 + $0x28] sm:$0xf0] %v396
        %v403 = vld [vmem:[%s289] sm:$0xff]
        %v404 = vld [vmem:[%s289 + $0x8] sm:$0xff]
        %v407 = vcombine.high %v403, %v403
        %v408 = vcombine.high %v404, %v404
        %409 = vrot.lane.b32.xlu0 %v403, 124
        %v410 = vpop.permute.xlu0 %409
        %411 = vrot.lane.b32.xlu0 %v407, 124
        %v412 = vpop.permute.xlu0 %411
        %413 = vrot.lane.b32.xlu0 %v404, 124
        %v414 = vpop.permute.xlu0 %413
        %415 = vrot.lane.b32.xlu0 %v408, 124
        %v416 = vpop.permute.xlu0 %415
        %vm417 = vcmask 1014784
        %v418 = vsel %vm417, %v410, %v412
        %v419 = vsel %vm417, %v412, %v414
        %v420 = vsel %vm417, %v414, %v416
        %424 = vst [vmem:[#allocation2 + $0x30] sm:$0xf] %v418
        %425 = vst [vmem:[#allocation2 + $0x38] sm:$0xf] %v419
        %426 = vst [vmem:[#allocation2 + $0x40] sm:$0xf] %v420
        %v427 = vld [vmem:[%s289] sm:$0xff]
        %v428 = vld [vmem:[%s289 + $0x8] sm:$0xff]
        %v431 = vcombine.low %v427, %v427
        %v432 = vcombine.low %v428, %v428
        %433 = vrot.lane.b32.xlu0 %v431, 104
        %v434 = vpop.permute.xlu0 %433
        %435 = vrot.lane.b32.xlu0 %v427, 104
        %v436 = vpop.permute.xlu0 %435
        %437 = vrot.lane.b32.xlu0 %v432, 104
        %v438 = vpop.permute.xlu0 %437
        %439 = vrot.lane.b32.xlu0 %v428, 104
        %v440 = vpop.permute.xlu0 %439
        %vm441 = vcmask 850944
        %v442 = vsel %vm441, %v434, %v436
        %v443 = vsel %vm441, %v436, %v438
        %v444 = vsel %vm441, %v438, %v440
        %448 = vst [vmem:[#allocation2 + $0x30] sm:$0xf0] %v442
        %449 = vst [vmem:[#allocation2 + $0x38] sm:$0xf0] %v443
        %450 = vst [vmem:[#allocation2 + $0x40] sm:$0xf0] %v444
        %v451 = vld [vmem:[%s289] sm:$0xff]
        %v452 = vld [vmem:[%s289 + $0x8] sm:$0xff]
        %v455 = vcombine.high %v451, %v451
        %v456 = vcombine.high %v452, %v452
        %457 = vrot.lane.b32.xlu0 %v451, 103
        %v458 = vpop.permute.xlu0 %457
        %459 = vrot.lane.b32.xlu0 %v455, 103
        %v460 = vpop.permute.xlu0 %459
        %461 = vrot.lane.b32.xlu0 %v452, 103
        %v462 = vpop.permute.xlu0 %461
        %463 = vrot.lane.b32.xlu0 %v456, 103
        %v464 = vpop.permute.xlu0 %463
        %vm465 = vcmask 842752
        %v466 = vsel %vm465, %v458, %v460
        %v467 = vsel %vm465, %v460, %v462
        %v468 = vsel %vm465, %v462, %v464
        %472 = vst [vmem:[#allocation2 + $0x48] sm:$0xf] %v466
        %473 = vst [vmem:[#allocation2 + $0x50] sm:$0xf] %v467
        %474 = vst [vmem:[#allocation2 + $0x58] sm:$0xf] %v468
        %v475 = vld [vmem:[%s289] sm:$0xff]
        %v476 = vld [vmem:[%s289 + $0x8] sm:$0xff]
        %v479 = vcombine.low %v475, %v475
        %v480 = vcombine.low %v476, %v476
        %481 = vrot.lane.b32.xlu0 %v479, 102
        %v482 = vpop.permute.xlu0 %481
        %483 = vrot.lane.b32.xlu0 %v475, 102
        %v484 = vpop.permute.xlu0 %483
        %485 = vrot.lane.b32.xlu0 %v480, 102
        %v486 = vpop.permute.xlu0 %485
        %487 = vrot.lane.b32.xlu0 %v476, 102
        %v488 = vpop.permute.xlu0 %487
        %vm489 = vcmask 834560
        %v490 = vsel %vm489, %v482, %v484
        %v491 = vsel %vm489, %v484, %v486
        %v492 = vsel %vm489, %v486, %v488
        %496 = vst [vmem:[#allocation2 + $0x48] sm:$0xf0] %v490
        %497 = vst [vmem:[#allocation2 + $0x50] sm:$0xf0] %v491
        %498 = vst [vmem:[#allocation2 + $0x58] sm:$0xf0] %v492
        %v499 = vld [vmem:[%s289] sm:$0xff]
        %v500 = vld [vmem:[%s289 + $0x8] sm:$0xff]
        %v503 = vcombine.high %v499, %v499
        %v504 = vcombine.high %v500, %v500
        %505 = vrot.lane.b32.xlu0 %v499, 101
        %v506 = vpop.permute.xlu0 %505
        %507 = vrot.lane.b32.xlu0 %v503, 101
        %v508 = vpop.permute.xlu0 %507
        %509 = vrot.lane.b32.xlu0 %v500, 101
        %v510 = vpop.permute.xlu0 %509
        %511 = vrot.lane.b32.xlu0 %v504, 101
        %v512 = vpop.permute.xlu0 %511
        %vm513 = vcmask 826368
        %v514 = vsel %vm513, %v506, %v508
        %v515 = vsel %vm513, %v508, %v510
        %v516 = vsel %vm513, %v510, %v512
        %520 = vst [vmem:[#allocation2 + $0x60] sm:$0xf] %v514
        %521 = vst [vmem:[#allocation2 + $0x68] sm:$0xf] %v515
        %522 = vst [vmem:[#allocation2 + $0x70] sm:$0xf] %v516
        %v523 = vld [vmem:[%s289] sm:$0xff]
        %v524 = vld [vmem:[%s289 + $0x8] sm:$0xff]
        %v527 = vcombine.low %v523, %v523
        %v528 = vcombine.low %v524, %v524
        %529 = vrot.lane.b32.xlu0 %v527, 100
        %v530 = vpop.permute.xlu0 %529
        %531 = vrot.lane.b32.xlu0 %v523, 100
        %v532 = vpop.permute.xlu0 %531
        %533 = vrot.lane.b32.xlu0 %v528, 100
        %v534 = vpop.permute.xlu0 %533
        %535 = vrot.lane.b32.xlu0 %v524, 100
        %v536 = vpop.permute.xlu0 %535
        %vm537 = vcmask 818176
        %v538 = vsel %vm537, %v530, %v532
        %v539 = vsel %vm537, %v532, %v534
        %v540 = vsel %vm537, %v534, %v536
        %544 = vst [vmem:[#allocation2 + $0x60] sm:$0xf0] %v538
        %545 = vst [vmem:[#allocation2 + $0x68] sm:$0xf0] %v539
        %546 = vst [vmem:[#allocation2 + $0x70] sm:$0xf0] %v540
        %v547 = vld [vmem:[%s289] sm:$0xff]
        %v548 = vld [vmem:[%s289 + $0x8] sm:$0xff]
        %v551 = vcombine.high %v547, %v547
        %v552 = vcombine.high %v548, %v548
        %553 = vrot.lane.b32.xlu0 %v547, 80
        %v554 = vpop.permute.xlu0 %553
        %555 = vrot.lane.b32.xlu0 %v551, 80
        %v556 = vpop.permute.xlu0 %555
        %557 = vrot.lane.b32.xlu0 %v548, 80
        %v558 = vpop.permute.xlu0 %557
        %559 = vrot.lane.b32.xlu0 %v552, 80
        %v560 = vpop.permute.xlu0 %559
        %vm561 = vcmask 654336
        %v562 = vsel %vm561, %v554, %v556
        %v563 = vsel %vm561, %v556, %v558
        %v564 = vsel %vm561, %v558, %v560
        %568 = vst [vmem:[#allocation2 + $0x78] sm:$0xf] %v562
        %569 = vst [vmem:[#allocation2 + $0x80] sm:$0xf] %v563
        %570 = vst [vmem:[#allocation2 + $0x88] sm:$0xf] %v564
        %v571 = vld [vmem:[%s289] sm:$0xff]
        %v572 = vld [vmem:[%s289 + $0x8] sm:$0xff]
        %v575 = vcombine.low %v571, %v571
        %v576 = vcombine.low %v572, %v572
        %577 = vrot.lane.b32.xlu0 %v575, 79
        %v578 = vpop.permute.xlu0 %577
        %579 = vrot.lane.b32.xlu0 %v571, 79
        %v580 = vpop.permute.xlu0 %579
        %581 = vrot.lane.b32.xlu0 %v576, 79
        %v582 = vpop.permute.xlu0 %581
        %583 = vrot.lane.b32.xlu0 %v572, 79
        %v584 = vpop.permute.xlu0 %583
        %vm585 = vcmask 646144
        %v586 = vsel %vm585, %v578, %v580
        %v587 = vsel %vm585, %v580, %v582
        %v588 = vsel %vm585, %v582, %v584
        %592 = vst [vmem:[#allocation2 + $0x78] sm:$0xf0] %v586
        %593 = vst [vmem:[#allocation2 + $0x80] sm:$0xf0] %v587
        %594 = vst [vmem:[#allocation2 + $0x88] sm:$0xf0] %v588
        %v595 = vld [vmem:[%s289] sm:$0xff]
        %v596 = vld [vmem:[%s289 + $0x8] sm:$0xff]
        %v599 = vcombine.high %v595, %v595
        %v600 = vcombine.high %v596, %v596
        %601 = vrot.lane.b32.xlu0 %v595, 78
        %v602 = vpop.permute.xlu0 %601
        %603 = vrot.lane.b32.xlu0 %v599, 78
        %v604 = vpop.permute.xlu0 %603
        %605 = vrot.lane.b32.xlu0 %v596, 78
        %v606 = vpop.permute.xlu0 %605
        %607 = vrot.lane.b32.xlu0 %v600, 78
        %v608 = vpop.permute.xlu0 %607
        %vm609 = vcmask 637952
        %v610 = vsel %vm609, %v602, %v604
        %v611 = vsel %vm609, %v604, %v606
        %v612 = vsel %vm609, %v606, %v608
        %616 = vst [vmem:[#allocation2 + $0x90] sm:$0xf] %v610
        %617 = vst [vmem:[#allocation2 + $0x98] sm:$0xf] %v611
        %618 = vst [vmem:[#allocation2 + $0xa0] sm:$0xf] %v612
        %v619 = vld [vmem:[%s289] sm:$0xff]
        %v620 = vld [vmem:[%s289 + $0x8] sm:$0xff]
        %v623 = vcombine.low %v619, %v619
        %v624 = vcombine.low %v620, %v620
        %625 = vrot.lane.b32.xlu0 %v623, 77
        %v626 = vpop.permute.xlu0 %625
        %627 = vrot.lane.b32.xlu0 %v619, 77
        %v628 = vpop.permute.xlu0 %627
        %629 = vrot.lane.b32.xlu0 %v624, 77
        %v630 = vpop.permute.xlu0 %629
        %631 = vrot.lane.b32.xlu0 %v620, 77
        %v632 = vpop.permute.xlu0 %631
        %vm633 = vcmask 629760
        %v634 = vsel %vm633, %v626, %v628
        %v635 = vsel %vm633, %v628, %v630
        %v636 = vsel %vm633, %v630, %v632
        %640 = vst [vmem:[#allocation2 + $0x90] sm:$0xf0] %v634
        %641 = vst [vmem:[#allocation2 + $0x98] sm:$0xf0] %v635
        %642 = vst [vmem:[#allocation2 + $0xa0] sm:$0xf0] %v636
        %v643 = vld [vmem:[%s289] sm:$0xff]
        %v644 = vld [vmem:[%s289 + $0x8] sm:$0xff]
        %v647 = vcombine.high %v643, %v643
        %v648 = vcombine.high %v644, %v644
        %649 = vrot.lane.b32.xlu0 %v643, 76
        %v650 = vpop.permute.xlu0 %649
        %651 = vrot.lane.b32.xlu0 %v647, 76
        %v652 = vpop.permute.xlu0 %651
        %653 = vrot.lane.b32.xlu0 %v644, 76
        %v654 = vpop.permute.xlu0 %653
        %655 = vrot.lane.b32.xlu0 %v648, 76
        %v656 = vpop.permute.xlu0 %655
        %vm657 = vcmask 621568
        %v658 = vsel %vm657, %v650, %v652
        %v659 = vsel %vm657, %v652, %v654
        %v660 = vsel %vm657, %v654, %v656
        %664 = vst [vmem:[#allocation2 + $0xa8] sm:$0xf] %v658
        %665 = vst [vmem:[#allocation2 + $0xb0] sm:$0xf] %v659
        %666 = vst [vmem:[#allocation2 + $0xb8] sm:$0xf] %v660
        %v667 = vld [vmem:[%s289] sm:$0xff]
        %v668 = vld [vmem:[%s289 + $0x8] sm:$0xff]
        %v671 = vcombine.low %v667, %v667
        %v672 = vcombine.low %v668, %v668
        %673 = vrot.lane.b32.xlu0 %v671, 56
        %v674 = vpop.permute.xlu0 %673
        %675 = vrot.lane.b32.xlu0 %v667, 56
        %v676 = vpop.permute.xlu0 %675
        %677 = vrot.lane.b32.xlu0 %v672, 56
        %v678 = vpop.permute.xlu0 %677
        %679 = vrot.lane.b32.xlu0 %v668, 56
        %v680 = vpop.permute.xlu0 %679
        %vm681 = vcmask 457728
        %v682 = vsel %vm681, %v674, %v676
        %v683 = vsel %vm681, %v676, %v678
        %v684 = vsel %vm681, %v678, %v680
        %688 = vst [vmem:[#allocation2 + $0xa8] sm:$0xf0] %v682
        %689 = vst [vmem:[#allocation2 + $0xb0] sm:$0xf0] %v683
        %690 = vst [vmem:[#allocation2 + $0xb8] sm:$0xf0] %v684
        %v691 = vld [vmem:[%s289] sm:$0xff]
        %v692 = vld [vmem:[%s289 + $0x8] sm:$0xff]
        %v695 = vcombine.high %v691, %v691
        %v696 = vcombine.high %v692, %v692
        %697 = vrot.lane.b32.xlu0 %v691, 55
        %v698 = vpop.permute.xlu0 %697
        %699 = vrot.lane.b32.xlu0 %v695, 55
        %v700 = vpop.permute.xlu0 %699
        %701 = vrot.lane.b32.xlu0 %v692, 55
        %v702 = vpop.permute.xlu0 %701
        %703 = vrot.lane.b32.xlu0 %v696, 55
        %v704 = vpop.permute.xlu0 %703
        %vm705 = vcmask 449536
        %v706 = vsel %vm705, %v698, %v700
        %v707 = vsel %vm705, %v700, %v702
        %v708 = vsel %vm705, %v702, %v704
        %712 = vst [vmem:[#allocation2 + $0xc0] sm:$0xf] %v706
        %713 = vst [vmem:[#allocation2 + $0xc8] sm:$0xf] %v707
        %714 = vst [vmem:[#allocation2 + $0xd0] sm:$0xf] %v708
        %v715 = vld [vmem:[%s289] sm:$0xff]
        %v716 = vld [vmem:[%s289 + $0x8] sm:$0xff]
        %v719 = vcombine.low %v715, %v715
        %v720 = vcombine.low %v716, %v716
        %721 = vrot.lane.b32.xlu0 %v719, 54
        %v722 = vpop.permute.xlu0 %721
        %723 = vrot.lane.b32.xlu0 %v715, 54
        %v724 = vpop.permute.xlu0 %723
        %725 = vrot.lane.b32.xlu0 %v720, 54
        %v726 = vpop.permute.xlu0 %725
        %727 = vrot.lane.b32.xlu0 %v716, 54
        %v728 = vpop.permute.xlu0 %727
        %vm729 = vcmask 441344
        %v730 = vsel %vm729, %v722, %v724
        %v731 = vsel %vm729, %v724, %v726
        %v732 = vsel %vm729, %v726, %v728
        %736 = vst [vmem:[#allocation2 + $0xc0] sm:$0xf0] %v730
        %737 = vst [vmem:[#allocation2 + $0xc8] sm:$0xf0] %v731
        %738 = vst [vmem:[#allocation2 + $0xd0] sm:$0xf0] %v732
        %v739 = vld [vmem:[%s289] sm:$0xff]
        %v740 = vld [vmem:[%s289 + $0x8] sm:$0xff]
        %v743 = vcombine.high %v739, %v739
        %v744 = vcombine.high %v740, %v740
        %745 = vrot.lane.b32.xlu0 %v739, 53
        %v746 = vpop.permute.xlu0 %745
        %747 = vrot.lane.b32.xlu0 %v743, 53
        %v748 = vpop.permute.xlu0 %747
        %749 = vrot.lane.b32.xlu0 %v740, 53
        %v750 = vpop.permute.xlu0 %749
        %751 = vrot.lane.b32.xlu0 %v744, 53
        %v752 = vpop.permute.xlu0 %751
        %vm753 = vcmask 433152
        %v754 = vsel %vm753, %v746, %v748
        %v755 = vsel %vm753, %v748, %v750
        %v756 = vsel %vm753, %v750, %v752
        %760 = vst [vmem:[#allocation2 + $0xd8] sm:$0xf] %v754
        %761 = vst [vmem:[#allocation2 + $0xe0] sm:$0xf] %v755
        %762 = vst [vmem:[#allocation2 + $0xe8] sm:$0xf] %v756
        %v763 = vld [vmem:[%s289] sm:$0xff]
        %v764 = vld [vmem:[%s289 + $0x8] sm:$0xff]
        %v767 = vcombine.low %v763, %v763
        %v768 = vcombine.low %v764, %v764
        %769 = vrot.lane.b32.xlu0 %v767, 52
        %v770 = vpop.permute.xlu0 %769
        %771 = vrot.lane.b32.xlu0 %v763, 52
        %v772 = vpop.permute.xlu0 %771
        %773 = vrot.lane.b32.xlu0 %v768, 52
        %v774 = vpop.permute.xlu0 %773
        %775 = vrot.lane.b32.xlu0 %v764, 52
        %v776 = vpop.permute.xlu0 %775
        %vm777 = vcmask 424960
        %v778 = vsel %vm777, %v770, %v772
        %v779 = vsel %vm777, %v772, %v774
        %v780 = vsel %vm777, %v774, %v776
        %784 = vst [vmem:[#allocation2 + $0xd8] sm:$0xf0] %v778
        %785 = vst [vmem:[#allocation2 + $0xe0] sm:$0xf0] %v779
        %786 = vst [vmem:[#allocation2 + $0xe8] sm:$0xf0] %v780
        %v787 = vld [vmem:[%s289] sm:$0xff]
        %v788 = vld [vmem:[%s289 + $0x8] sm:$0xff]
        %v791 = vcombine.high %v787, %v787
        %v792 = vcombine.high %v788, %v788
        %793 = vrot.lane.b32.xlu0 %v787, 32
        %v794 = vpop.permute.xlu0 %793
        %795 = vrot.lane.b32.xlu0 %v791, 32
        %v796 = vpop.permute.xlu0 %795
        %797 = vrot.lane.b32.xlu0 %v788, 32
        %v798 = vpop.permute.xlu0 %797
        %799 = vrot.lane.b32.xlu0 %v792, 32
        %v800 = vpop.permute.xlu0 %799
        %vm801 = vcmask 261120
        %v802 = vsel %vm801, %v794, %v796
        %v803 = vsel %vm801, %v796, %v798
        %v804 = vsel %vm801, %v798, %v800
        %808 = vst [vmem:[#allocation2 + $0xf0] sm:$0xf] %v802
        %809 = vst [vmem:[#allocation2 + $0xf8] sm:$0xf] %v803
        %810 = vst [vmem:[#allocation2 + $0x100] sm:$0xf] %v804
        %v811 = vld [vmem:[%s289] sm:$0xff]
        %v812 = vld [vmem:[%s289 + $0x8] sm:$0xff]
        %v815 = vcombine.low %v811, %v811
        %v816 = vcombine.low %v812, %v812
        %817 = vrot.lane.b32.xlu0 %v815, 31
        %v818 = vpop.permute.xlu0 %817
        %819 = vrot.lane.b32.xlu0 %v811, 31
        %v820 = vpop.permute.xlu0 %819
        %821 = vrot.lane.b32.xlu0 %v816, 31
        %v822 = vpop.permute.xlu0 %821
        %823 = vrot.lane.b32.xlu0 %v812, 31
        %v824 = vpop.permute.xlu0 %823
        %vm825 = vcmask 252928
        %v826 = vsel %vm825, %v818, %v820
        %v827 = vsel %vm825, %v820, %v822
        %v828 = vsel %vm825, %v822, %v824
        %832 = vst [vmem:[#allocation2 + $0xf0] sm:$0xf0] %v826
        %833 = vst [vmem:[#allocation2 + $0xf8] sm:$0xf0] %v827
        %834 = vst [vmem:[#allocation2 + $0x100] sm:$0xf0] %v828
        %v835 = vld [vmem:[%s289] sm:$0xff]
        %v836 = vld [vmem:[%s289 + $0x8] sm:$0xff]
        %v839 = vcombine.high %v835, %v835
        %v840 = vcombine.high %v836, %v836
        %841 = vrot.lane.b32.xlu0 %v835, 30
        %v842 = vpop.permute.xlu0 %841
        %843 = vrot.lane.b32.xlu0 %v839, 30
        %v844 = vpop.permute.xlu0 %843
        %845 = vrot.lane.b32.xlu0 %v836, 30
        %v846 = vpop.permute.xlu0 %845
        %847 = vrot.lane.b32.xlu0 %v840, 30
        %v848 = vpop.permute.xlu0 %847
        %vm849 = vcmask 244736
        %v850 = vsel %vm849, %v842, %v844
        %v851 = vsel %vm849, %v844, %v846
        %v852 = vsel %vm849, %v846, %v848
        %856 = vst [vmem:[#allocation2 + $0x108] sm:$0xf] %v850
        %857 = vst [vmem:[#allocation2 + $0x110] sm:$0xf] %v851
        %858 = vst [vmem:[#allocation2 + $0x118] sm:$0xf] %v852
        %v859 = vld [vmem:[%s289] sm:$0xff]
        %v860 = vld [vmem:[%s289 + $0x8] sm:$0xff]
        %v863 = vcombine.low %v859, %v859
        %v864 = vcombine.low %v860, %v860
        %865 = vrot.lane.b32.xlu0 %v863, 29
        %v866 = vpop.permute.xlu0 %865
        %867 = vrot.lane.b32.xlu0 %v859, 29
        %v868 = vpop.permute.xlu0 %867
        %869 = vrot.lane.b32.xlu0 %v864, 29
        %v870 = vpop.permute.xlu0 %869
        %871 = vrot.lane.b32.xlu0 %v860, 29
        %v872 = vpop.permute.xlu0 %871
        %vm873 = vcmask 236544
        %v874 = vsel %vm873, %v866, %v868
        %v875 = vsel %vm873, %v868, %v870
        %v876 = vsel %vm873, %v870, %v872
        %880 = vst [vmem:[#allocation2 + $0x108] sm:$0xf0] %v874
        %881 = vst [vmem:[#allocation2 + $0x110] sm:$0xf0] %v875
        %882 = vst [vmem:[#allocation2 + $0x118] sm:$0xf0] %v876
        %v883 = vld [vmem:[%s289] sm:$0xff]
        %v884 = vld [vmem:[%s289 + $0x8] sm:$0xff]
        %v887 = vcombine.high %v883, %v883
        %v888 = vcombine.high %v884, %v884
        %889 = vrot.lane.b32.xlu0 %v883, 28
        %v890 = vpop.permute.xlu0 %889
        %891 = vrot.lane.b32.xlu0 %v887, 28
        %v892 = vpop.permute.xlu0 %891
        %893 = vrot.lane.b32.xlu0 %v884, 28
        %v894 = vpop.permute.xlu0 %893
        %895 = vrot.lane.b32.xlu0 %v888, 28
        %v896 = vpop.permute.xlu0 %895
        %vm897 = vcmask 228352
        %v898 = vsel %vm897, %v890, %v892
        %v899 = vsel %vm897, %v892, %v894
        %v900 = vsel %vm897, %v894, %v896
        %904 = vst [vmem:[#allocation2 + $0x120] sm:$0xf] %v898
        %905 = vst [vmem:[#allocation2 + $0x128] sm:$0xf] %v899
        %906 = vst [vmem:[#allocation2 + $0x130] sm:$0xf] %v900
        %v907 = vld [vmem:[%s2] sm:$0xf]
        %v908 = vld [vmem:[#allocation2] sm:$0xff]
        %v909 = vld [vmem:[#allocation2 + $0x8] sm:$0xff]
        %v910 = vld [vmem:[#allocation2 + $0x10] sm:$0xff]
        %v911 = vld [vmem:[#allocation2 + $0x18] sm:$0xff]
        %v912 = vld [vmem:[#allocation2 + $0x20] sm:$0xff]
        %v913 = vld [vmem:[#allocation2 + $0x28] sm:$0xff]
        %v914 = vld [vmem:[#allocation2 + $0x30] sm:$0xff]
        %v915 = vld [vmem:[#allocation2 + $0x38] sm:$0xff]
        %v916 = vld [vmem:[#allocation2 + $0x40] sm:$0xff]
        %v917 = vld [vmem:[#allocation2 + $0x48] sm:$0xff]
        %v918 = vld [vmem:[#allocation2 + $0x50] sm:$0xff]
        %v919 = vld [vmem:[#allocation2 + $0x58] sm:$0xff]
        %v920 = vld [vmem:[#allocation2 + $0x60] sm:$0xff]
        %v921 = vld [vmem:[#allocation2 + $0x68] sm:$0xff]
        %v922 = vld [vmem:[#allocation2 + $0x70] sm:$0xff]
        %v923 = vld [vmem:[#allocation2 + $0x78] sm:$0xff]
        %v924 = vld [vmem:[#allocation2 + $0x80] sm:$0xff]
        %v925 = vld [vmem:[#allocation2 + $0x88] sm:$0xff]
        %v926 = vld [vmem:[#allocation2 + $0x90] sm:$0xff]
        %v927 = vld [vmem:[#allocation2 + $0x98] sm:$0xff]
        %v928 = vld [vmem:[#allocation2 + $0xa0] sm:$0xff]
        %v929 = vld [vmem:[#allocation2 + $0xa8] sm:$0xff]
        %v930 = vld [vmem:[#allocation2 + $0xb0] sm:$0xff]
        %v931 = vld [vmem:[#allocation2 + $0xb8] sm:$0xff]
        %v932 = vld [vmem:[#allocation2 + $0xc0] sm:$0xff]
        %v933 = vld [vmem:[#allocation2 + $0xc8] sm:$0xff]
        %v934 = vld [vmem:[#allocation2 + $0xd0] sm:$0xff]
        %v935 = vld [vmem:[#allocation2 + $0xd8] sm:$0xff]
        %v936 = vld [vmem:[#allocation2 + $0xe0] sm:$0xff]
        %v937 = vld [vmem:[#allocation2 + $0xe8] sm:$0xff]
        %v938 = vld [vmem:[#allocation2 + $0xf0] sm:$0xff]
        %v939 = vld [vmem:[#allocation2 + $0xf8] sm:$0xff]
        %v940 = vld [vmem:[#allocation2 + $0x100] sm:$0xff]
        %v941 = vld [vmem:[#allocation2 + $0x108] sm:$0xff]
        %v942 = vld [vmem:[#allocation2 + $0x110] sm:$0xff]
        %v943 = vld [vmem:[#allocation2 + $0x118] sm:$0xff]
        %v944 = vld [vmem:[#allocation2 + $0x120] sm:$0xf]
        %v945 = vld [vmem:[#allocation2 + $0x128] sm:$0xf]
        %v946 = vld [vmem:[#allocation2 + $0x130] sm:$0xf]
        %v948 = vsel %vm537, %v907, 0
        %vm950 = vcmask 1043456
        %v952 = vsel %vm950, %v944, 0
        %v955 = vsel %vm950, %v945, 0
        %v958 = vsel %vm950, %v946, 0
        %960 = vmatprep.subr.mxu0 %v909
        %961 = vmatpush1.msra.mxu0 %v908
        %962 = vmatprep.subr.mxu0 %v912
        %963 = vmatpush1.msra.mxu0 %v911
        %964 = vmatprep.subr.mxu0 %v915
        %965 = vmatpush1.msra.mxu0 %v914
        %966 = vmatprep.subr.mxu0 %v918
        %967 = vmatpush1.msra.mxu0 %v917
        %968 = vmatprep.subr.mxu0 %v921
        %969 = vmatpush1.msra.mxu0 %v920
        %970 = vmatprep.subr.mxu0 %v924
        %971 = vmatpush1.msra.mxu0 %v923
        %972 = vmatprep.subr.mxu0 %v927
        %973 = vmatpush1.msra.mxu0 %v926
        %974 = vmatprep.subr.mxu0 %v930
        %975 = vmatpush1.msra.mxu0 %v929
        %976 = vmatprep.subr.mxu0 %v933
        %977 = vmatpush1.msra.mxu0 %v932
        %978 = vmatprep.subr.mxu0 %v936
        %979 = vmatpush1.msra.mxu0 %v935
        %980 = vmatprep.subr.mxu0 %v939
        %981 = vmatpush1.msra.mxu0 %v938
        %982 = vmatprep.subr.mxu0 %v942
        %983 = vmatpush1.msra.mxu0 %v941
        %984 = vmatprep.subr.mxu0 %v955
        %985 = vmatpush1.msra.mxu0 %v952
        %986 = vmatprep.subr.mxu0 0.0
        %987 = vmatpush1.msra.mxu0 0.0
        %988 = vmatprep.subr.mxu0 0.0
        %989 = vmatpush1.msra.mxu0 0.0
        %990 = vmatprep.subr.mxu0 0.0
        %991 = vmatpush1.msra.mxu0 0.0
        %992 = vmatprep.subr.mxu0 0.0
        %993 = vmatpush1.msra.mxu0 0.0
        %994 = vmatprep.subr.mxu0 0.0
        %995 = vmatpush1.msra.mxu0 0.0
        %996 = vmatprep.subr.mxu0 0.0
        %997 = vmatpush1.msra.mxu0 0.0
        %998 = vmatprep.subr.mxu0 0.0
        %999 = vmatpush1.msra.mxu0 0.0
        %1000 = vmatprep.subr.mxu0 0.0
        %1001 = vmatpush1.msra.mxu0 0.0
        %1002 = vmatprep.subr.mxu0 0.0
        %1003 = vmatpush1.msra.mxu0 0.0
        %1004 = vmatprep.subr.mxu0 0.0
        %1005 = vmatpush1.msra.mxu0 0.0
        %1006 = vmatprep.subr.mxu0 0.0
        %1007 = vmatpush1.msra.mxu0 0.0
        %1008 = vmatprep.subr.mxu0 0.0
        %1009 = vmatpush1.msra.mxu0 0.0
        %1010 = vmatprep.subr.mxu0 0.0
        %1011 = vmatpush1.msra.mxu0 0.0
        %1012 = vmatprep.subr.mxu0 0.0
        %1013 = vmatpush1.msra.mxu0 0.0
        %1014 = vmatprep.subr.mxu0 0.0
        %1015 = vmatpush1.msra.mxu0 0.0
        %1016 = vmatprep.subr.mxu0 0.0
        %1017 = vmatpush1.msra.mxu0 0.0
        %1018 = vmatprep.subr.mxu0 0.0
        %1019 = vmatpush1.msra.mxu0 0.0
        %1020 = vmatprep.subr.mxu0 0.0
        %1021 = vmatpush1.msra.mxu0 0.0
        %1022 = vmatprep.subr.mxu0 0.0
        %1023 = vmatpush1.msra.mxu0 0.0
        %1024 = vmatprep.mubr.f32.mxu0 0.0
        %1025 = vmatmul.mubr.f32.gmra.mrb[0].mxu0 %v948
        %v1026 = vpop.f32.mrb[0].mxu0
        %v1027 = vadd.f32 0.0, %v1026
        %v1028 = vpop.f32.mrb[0].mxu0
        %v1029 = vadd.f32 0.0, %v1028
        %1030 = vdwg.mxu0
        %1031 = vmatprep.subr.mxu0 0.0
        %1032 = vmatpush1.msra.mxu0 %v910
        %1033 = vmatprep.subr.mxu0 0.0
        %1034 = vmatpush1.msra.mxu0 %v913
        %1035 = vmatprep.subr.mxu0 0.0
        %1036 = vmatpush1.msra.mxu0 %v916
        %1037 = vmatprep.subr.mxu0 0.0
        %1038 = vmatpush1.msra.mxu0 %v919
        %1039 = vmatprep.subr.mxu0 0.0
        %1040 = vmatpush1.msra.mxu0 %v922
        %1041 = vmatprep.subr.mxu0 0.0
        %1042 = vmatpush1.msra.mxu0 %v925
        %1043 = vmatprep.subr.mxu0 0.0
        %1044 = vmatpush1.msra.mxu0 %v928
        %1045 = vmatprep.subr.mxu0 0.0
        %1046 = vmatpush1.msra.mxu0 %v931
        %1047 = vmatprep.subr.mxu0 0.0
        %1048 = vmatpush1.msra.mxu0 %v934
        %1049 = vmatprep.subr.mxu0 0.0
        %1050 = vmatpush1.msra.mxu0 %v937
        %1051 = vmatprep.subr.mxu0 0.0
        %1052 = vmatpush1.msra.mxu0 %v940
        %1053 = vmatprep.subr.mxu0 0.0
        %1054 = vmatpush1.msra.mxu0 %v943
        %1055 = vmatprep.subr.mxu0 0.0
        %1056 = vmatpush1.msra.mxu0 %v958
        %1057 = vmatprep.subr.mxu0 0.0
        %1058 = vmatpush1.msra.mxu0 0.0
        %1059 = vmatprep.subr.mxu0 0.0
        %1060 = vmatpush1.msra.mxu0 0.0
        %1061 = vmatprep.subr.mxu0 0.0
        %1062 = vmatpush1.msra.mxu0 0.0
        %1063 = vmatprep.subr.mxu0 0.0
        %1064 = vmatpush1.msra.mxu0 0.0
        %1065 = vmatprep.subr.mxu0 0.0
        %1066 = vmatpush1.msra.mxu0 0.0
        %1067 = vmatprep.subr.mxu0 0.0
        %1068 = vmatpush1.msra.mxu0 0.0
        %1069 = vmatprep.subr.mxu0 0.0
        %1070 = vmatpush1.msra.mxu0 0.0
        %1071 = vmatprep.subr.mxu0 0.0
        %1072 = vmatpush1.msra.mxu0 0.0
        %1073 = vmatprep.subr.mxu0 0.0
        %1074 = vmatpush1.msra.mxu0 0.0
        %1075 = vmatprep.subr.mxu0 0.0
        %1076 = vmatpush1.msra.mxu0 0.0
        %1077 = vmatprep.subr.mxu0 0.0
        %1078 = vmatpush1.msra.mxu0 0.0
        %1079 = vmatprep.subr.mxu0 0.0
        %1080 = vmatpush1.msra.mxu0 0.0
        %1081 = vmatprep.subr.mxu0 0.0
        %1082 = vmatpush1.msra.mxu0 0.0
        %1083 = vmatprep.subr.mxu0 0.0
        %1084 = vmatpush1.msra.mxu0 0.0
        %1085 = vmatprep.subr.mxu0 0.0
        %1086 = vmatpush1.msra.mxu0 0.0
        %1087 = vmatprep.subr.mxu0 0.0
        %1088 = vmatpush1.msra.mxu0 0.0
        %1089 = vmatprep.subr.mxu0 0.0
        %1090 = vmatpush1.msra.mxu0 0.0
        %1091 = vmatprep.subr.mxu0 0.0
        %1092 = vmatpush1.msra.mxu0 0.0
        %1093 = vmatprep.subr.mxu0 0.0
        %1094 = vmatpush1.msra.mxu0 0.0
        %1095 = vmatprep.mubr.f32.mxu0 0.0
        %1096 = vmatmul.mubr.f32.gmra.mrb[0].mxu0 %v948
        %v1097 = vpop.f32.mrb[0].mxu0
        %v1098 = vadd.f32 0.0, %v1097
        %v1099 = vpop.f32.mrb[0].mxu0
        %1100 = vdwg.mxu0
        %v1102 = vlaneseq
        %v1103 = vshrl.u32 %v1102, 7
        %v1104 = vsub.s32 0, %v1103
        %v1105 = vrot.slane %v322, %v1104
        %v1106 = vlaneseq
        %v1107 = vshrl.u32 %v1106, 7
        %v1108 = vsub.s32 1, %v1107
        %v1109 = vrot.slane %v322, %v1108
        %v1110 = vlaneseq
        %v1111 = vshrl.u32 %v1110, 7
        %v1112 = vsub.s32 2, %v1111
        %v1113 = vrot.slane %v322, %v1112
        %v1117 = vmul.f32 %v1027, %v1105
        %v1118 = vmul.f32 %v1029, %v1109
        %v1119 = vmul.f32 %v1098, %v1113
        %v1120 = vsel %vm950, %v1117, 0.0
        %v1121 = vsel %vm950, %v1118, 0.0
        %v1122 = vadd.f32 %v1120, %v1121
        %v1123 = vsel %vm950, %v1119, 0.0
        %v1124 = vadd.f32 %v1122, %v1123
        %1125 = vadd.xlane.f32.xlu0 %v1124
        %v1126 = vpop.xlane.xlu0 %1125
        %v1127 = vmul.f32 %v1117, %v1027
        %v1128 = vmul.f32 %v1118, %v1029
        %v1129 = vmul.f32 %v1119, %v1098
        %v1130 = vsel %vm950, %v1127, 0.0
        %v1131 = vsel %vm950, %v1128, 0.0
        %v1132 = vadd.f32 %v1130, %v1131
        %v1133 = vsel %vm950, %v1129, 0.0
        %v1134 = vadd.f32 %v1132, %v1133
        %1135 = vadd.xlane.f32.xlu0 %v1134
        %v1136 = vpop.xlane.xlu0 %1135
        %v1137 = vmul.f32 %v1126, 0.00390625
        %v1138 = vmul.f32 %v1136, 0.00390625
        %v1139 = vmul.f32 %v1137, %v1137
        %v1140 = vsub.f32 %v1138, %v1139
        %v1141 = vsub.f32 %v1027, %v1137
        %v1142 = vsub.f32 %v1029, %v1137
        %v1143 = vsub.f32 %v1098, %v1137
        %v1144 = vadd.f32 %v1140, 1e-05
        %v1145 = vrsqrt.pop %v1144
        %v1146 = vmul.f32 %v1141, %v1145
        %v1147 = vmul.f32 %v1142, %v1145
        %v1148 = vmul.f32 %v1143, %v1145
        %v1149 = vld [vmem:[%s3] sm:$0xf]
        %1151 = vset.pattern.permute.xlu0 0
        %1152 = vperm.xlu0 %1151, %v1149
        %v1153 = vpop.permute.xlu0 %1152
        %v1155 = vmul.f32 %v1146, %v1153
        %v1156 = vmul.f32 %v1147, %v1153
        %v1157 = vmul.f32 %v1148, %v1153
        %v1158 = vld [vmem:[%s4] sm:$0xf]
        %1160 = vset.pattern.permute.xlu0 0
        %1161 = vperm.xlu0 %1160, %v1158
        %v1162 = vpop.permute.xlu0 %1161
        %v1164 = vadd.f32 %v1155, %v1162
        %v1165 = vadd.f32 %v1156, %v1162
        %v1166 = vadd.f32 %v1157, %v1162
        %v1167 = vmax.f32 %v1164, 0.0
        %v1168 = vmax.f32 %v1165, 0.0
        %v1169 = vmax.f32 %v1166, 0.0
        %v1170 = vmul.f32 %v1167, %v1105
        %v1171 = vmul.f32 %v1168, %v1109
        %v1172 = vmul.f32 %v1169, %v1113
        %vm1173 = vcmask 404480
        %1174 = vst.msk [vmem:[#allocation3] sm:$0xf] %vm1173, 0.0
        %vm1175 = vcmask 978320
        %1176 = vst.msk [vmem:[#allocation3 + $0xc] sm:$0xf] %vm1175, 0.0
        %v1180 = vcombine.low %v1170, %v1171
        %1181 = vrot.lane.b32.xlu0 %v1180, 50
        %v1182 = vpop.permute.xlu0 %1181
        %1183 = vrot.lane.b32.xlu0 %v1172, 50
        %v1184 = vpop.permute.xlu0 %1183
        %v1185 = vrot.slane %v1182, 4
        %v1186 = vrot.slane %v1184, 4
        %vm1187 = vcmask 408576
        %v1188 = vsel %vm1187, %v1185, %v1182
        %v1189 = vsel %vm950, %v1185, %v1186
        %v1190 = vsel %vm1187, %v1189, %v1184
        %vm1193 = vcmask 1043856
        %vm1194 = vcmask 1047556
        %vm1195 = vmor %vm1194, %vm1193
        %1196 = vst.msk [vmem:[#allocation3] sm:$0xff] %vm1195, %v1188
        %vm1197 = vcmask 408580
        %vm1198 = vmor %vm1197, %vm950
        %1199 = vst.msk [vmem:[#allocation3 + $0x8] sm:$0xff] %vm1198, %v1190
        %v1200 = vld [vmem:[#allocation3] sm:$0xff]
        %v1201 = vld [vmem:[#allocation3 + $0x8] sm:$0xf]
        %v1203 = vcombine.high %v1200, %v1200
        %1205 = vst [vmem:[#allocation2] sm:$0xf] %v1200
        %1206 = vst [vmem:[#allocation2 + $0x8] sm:$0xf] %v1203
        %1207 = vst [vmem:[#allocation2 + $0x10] sm:$0xf] %v1201
        %v1208 = vld [vmem:[#allocation3] sm:$0xff]
        %v1209 = vld [vmem:[#allocation3 + $0x8] sm:$0xff]
        %v1212 = vcombine.low %v1208, %v1208
        %v1213 = vcombine.low %v1209, %v1209
        %1214 = vrot.lane.b32.xlu0 %v1212, 127
        %v1215 = vpop.permute.xlu0 %1214
        %1216 = vrot.lane.b32.xlu0 %v1208, 127
        %v1217 = vpop.permute.xlu0 %1216
        %1218 = vrot.lane.b32.xlu0 %v1213, 127
        %v1219 = vpop.permute.xlu0 %1218
        %1220 = vrot.lane.b32.xlu0 %v1209, 127
        %v1221 = vpop.permute.xlu0 %1220
        %v1222 = vsel %vm345, %v1215, %v1217
        %v1223 = vsel %vm345, %v1217, %v1219
        %v1224 = vsel %vm345, %v1219, %v1221
        %1228 = vst [vmem:[#allocation2] sm:$0xf0] %v1222
        %1229 = vst [vmem:[#allocation2 + $0x8] sm:$0xf0] %v1223
        %1230 = vst [vmem:[#allocation2 + $0x10] sm:$0xf0] %v1224
        %v1231 = vld [vmem:[#allocation3] sm:$0xff]
        %v1232 = vld [vmem:[#allocation3 + $0x8] sm:$0xff]
        %v1235 = vcombine.high %v1231, %v1231
        %v1236 = vcombine.high %v1232, %v1232
        %1237 = vrot.lane.b32.xlu0 %v1231, 126
        %v1238 = vpop.permute.xlu0 %1237
        %1239 = vrot.lane.b32.xlu0 %v1235, 126
        %v1240 = vpop.permute.xlu0 %1239
        %1241 = vrot.lane.b32.xlu0 %v1232, 126
        %v1242 = vpop.permute.xlu0 %1241
        %1243 = vrot.lane.b32.xlu0 %v1236, 126
        %v1244 = vpop.permute.xlu0 %1243
        %v1245 = vsel %vm369, %v1238, %v1240
        %v1246 = vsel %vm369, %v1240, %v1242
        %v1247 = vsel %vm369, %v1242, %v1244
        %1251 = vst [vmem:[#allocation2 + $0x18] sm:$0xf] %v1245
        %1252 = vst [vmem:[#allocation2 + $0x20] sm:$0xf] %v1246
        %1253 = vst [vmem:[#allocation2 + $0x28] sm:$0xf] %v1247
        %v1254 = vld [vmem:[#allocation3] sm:$0xff]
        %v1255 = vld [vmem:[#allocation3 + $0x8] sm:$0xff]
        %v1258 = vcombine.low %v1254, %v1254
        %v1259 = vcombine.low %v1255, %v1255
        %1260 = vrot.lane.b32.xlu0 %v1258, 125
        %v1261 = vpop.permute.xlu0 %1260
        %1262 = vrot.lane.b32.xlu0 %v1254, 125
        %v1263 = vpop.permute.xlu0 %1262
        %1264 = vrot.lane.b32.xlu0 %v1259, 125
        %v1265 = vpop.permute.xlu0 %1264
        %1266 = vrot.lane.b32.xlu0 %v1255, 125
        %v1267 = vpop.permute.xlu0 %1266
        %v1268 = vsel %vm393, %v1261, %v1263
        %v1269 = vsel %vm393, %v1263, %v1265
        %v1270 = vsel %vm393, %v1265, %v1267
        %1274 = vst [vmem:[#allocation2 + $0x18] sm:$0xf0] %v1268
        %1275 = vst [vmem:[#allocation2 + $0x20] sm:$0xf0] %v1269
        %1276 = vst [vmem:[#allocation2 + $0x28] sm:$0xf0] %v1270
        %v1277 = vld [vmem:[#allocation3] sm:$0xff]
        %v1278 = vld [vmem:[#allocation3 + $0x8] sm:$0xff]
        %v1281 = vcombine.high %v1277, %v1277
        %v1282 = vcombine.high %v1278, %v1278
        %1283 = vrot.lane.b32.xlu0 %v1277, 124
        %v1284 = vpop.permute.xlu0 %1283
        %1285 = vrot.lane.b32.xlu0 %v1281, 124
        %v1286 = vpop.permute.xlu0 %1285
        %1287 = vrot.lane.b32.xlu0 %v1278, 124
        %v1288 = vpop.permute.xlu0 %1287
        %1289 = vrot.lane.b32.xlu0 %v1282, 124
        %v1290 = vpop.permute.xlu0 %1289
        %v1291 = vsel %vm417, %v1284, %v1286
        %v1292 = vsel %vm417, %v1286, %v1288
        %v1293 = vsel %vm417, %v1288, %v1290
        %1297 = vst [vmem:[#allocation2 + $0x30] sm:$0xf] %v1291
        %1298 = vst [vmem:[#allocation2 + $0x38] sm:$0xf] %v1292
        %1299 = vst [vmem:[#allocation2 + $0x40] sm:$0xf] %v1293
        %v1300 = vld [vmem:[#allocation3] sm:$0xff]
        %v1301 = vld [vmem:[#allocation3 + $0x8] sm:$0xff]
        %v1304 = vcombine.low %v1300, %v1300
        %v1305 = vcombine.low %v1301, %v1301
        %1306 = vrot.lane.b32.xlu0 %v1304, 104
        %v1307 = vpop.permute.xlu0 %1306
        %1308 = vrot.lane.b32.xlu0 %v1300, 104
        %v1309 = vpop.permute.xlu0 %1308
        %1310 = vrot.lane.b32.xlu0 %v1305, 104
        %v1311 = vpop.permute.xlu0 %1310
        %1312 = vrot.lane.b32.xlu0 %v1301, 104
        %v1313 = vpop.permute.xlu0 %1312
        %v1314 = vsel %vm441, %v1307, %v1309
        %v1315 = vsel %vm441, %v1309, %v1311
        %v1316 = vsel %vm441, %v1311, %v1313
        %1320 = vst [vmem:[#allocation2 + $0x30] sm:$0xf0] %v1314
        %1321 = vst [vmem:[#allocation2 + $0x38] sm:$0xf0] %v1315
        %1322 = vst [vmem:[#allocation2 + $0x40] sm:$0xf0] %v1316
        %v1323 = vld [vmem:[#allocation3] sm:$0xff]
        %v1324 = vld [vmem:[#allocation3 + $0x8] sm:$0xff]
        %v1327 = vcombine.high %v1323, %v1323
        %v1328 = vcombine.high %v1324, %v1324
        %1329 = vrot.lane.b32.xlu0 %v1323, 103
        %v1330 = vpop.permute.xlu0 %1329
        %1331 = vrot.lane.b32.xlu0 %v1327, 103
        %v1332 = vpop.permute.xlu0 %1331
        %1333 = vrot.lane.b32.xlu0 %v1324, 103
        %v1334 = vpop.permute.xlu0 %1333
        %1335 = vrot.lane.b32.xlu0 %v1328, 103
        %v1336 = vpop.permute.xlu0 %1335
        %v1337 = vsel %vm465, %v1330, %v1332
        %v1338 = vsel %vm465, %v1332, %v1334
        %v1339 = vsel %vm465, %v1334, %v1336
        %1343 = vst [vmem:[#allocation2 + $0x48] sm:$0xf] %v1337
        %1344 = vst [vmem:[#allocation2 + $0x50] sm:$0xf] %v1338
        %1345 = vst [vmem:[#allocation2 + $0x58] sm:$0xf] %v1339
        %v1346 = vld [vmem:[#allocation3] sm:$0xff]
        %v1347 = vld [vmem:[#allocation3 + $0x8] sm:$0xff]
        %v1350 = vcombine.low %v1346, %v1346
        %v1351 = vcombine.low %v1347, %v1347
        %1352 = vrot.lane.b32.xlu0 %v1350, 102
        %v1353 = vpop.permute.xlu0 %1352
        %1354 = vrot.lane.b32.xlu0 %v1346, 102
        %v1355 = vpop.permute.xlu0 %1354
        %1356 = vrot.lane.b32.xlu0 %v1351, 102
        %v1357 = vpop.permute.xlu0 %1356
        %1358 = vrot.lane.b32.xlu0 %v1347, 102
        %v1359 = vpop.permute.xlu0 %1358
        %v1360 = vsel %vm489, %v1353, %v1355
        %v1361 = vsel %vm489, %v1355, %v1357
        %v1362 = vsel %vm489, %v1357, %v1359
        %1366 = vst [vmem:[#allocation2 + $0x48] sm:$0xf0] %v1360
        %1367 = vst [vmem:[#allocation2 + $0x50] sm:$0xf0] %v1361
        %1368 = vst [vmem:[#allocation2 + $0x58] sm:$0xf0] %v1362
        %v1369 = vld [vmem:[#allocation3] sm:$0xff]
        %v1370 = vld [vmem:[#allocation3 + $0x8] sm:$0xff]
        %v1373 = vcombine.high %v1369, %v1369
        %v1374 = vcombine.high %v1370, %v1370
        %1375 = vrot.lane.b32.xlu0 %v1369, 101
        %v1376 = vpop.permute.xlu0 %1375
        %1377 = vrot.lane.b32.xlu0 %v1373, 101
        %v1378 = vpop.permute.xlu0 %1377
        %1379 = vrot.lane.b32.xlu0 %v1370, 101
        %v1380 = vpop.permute.xlu0 %1379
        %1381 = vrot.lane.b32.xlu0 %v1374, 101
        %v1382 = vpop.permute.xlu0 %1381
        %v1383 = vsel %vm513, %v1376, %v1378
        %v1384 = vsel %vm513, %v1378, %v1380
        %v1385 = vsel %vm513, %v1380, %v1382
        %1389 = vst [vmem:[#allocation2 + $0x60] sm:$0xf] %v1383
        %1390 = vst [vmem:[#allocation2 + $0x68] sm:$0xf] %v1384
        %1391 = vst [vmem:[#allocation2 + $0x70] sm:$0xf] %v1385
        %v1392 = vld [vmem:[#allocation3] sm:$0xff]
        %v1393 = vld [vmem:[#allocation3 + $0x8] sm:$0xff]
        %v1396 = vcombine.low %v1392, %v1392
        %v1397 = vcombine.low %v1393, %v1393
        %1398 = vrot.lane.b32.xlu0 %v1396, 100
        %v1399 = vpop.permute.xlu0 %1398
        %1400 = vrot.lane.b32.xlu0 %v1392, 100
        %v1401 = vpop.permute.xlu0 %1400
        %1402 = vrot.lane.b32.xlu0 %v1397, 100
        %v1403 = vpop.permute.xlu0 %1402
        %1404 = vrot.lane.b32.xlu0 %v1393, 100
        %v1405 = vpop.permute.xlu0 %1404
        %v1406 = vsel %vm537, %v1399, %v1401
        %v1407 = vsel %vm537, %v1401, %v1403
        %v1408 = vsel %vm537, %v1403, %v1405
        %1412 = vst [vmem:[#allocation2 + $0x60] sm:$0xf0] %v1406
        %1413 = vst [vmem:[#allocation2 + $0x68] sm:$0xf0] %v1407
        %1414 = vst [vmem:[#allocation2 + $0x70] sm:$0xf0] %v1408
        %v1415 = vld [vmem:[#allocation3] sm:$0xff]
        %v1416 = vld [vmem:[#allocation3 + $0x8] sm:$0xff]
        %v1419 = vcombine.high %v1415, %v1415
        %v1420 = vcombine.high %v1416, %v1416
        %1421 = vrot.lane.b32.xlu0 %v1415, 80
        %v1422 = vpop.permute.xlu0 %1421
        %1423 = vrot.lane.b32.xlu0 %v1419, 80
        %v1424 = vpop.permute.xlu0 %1423
        %1425 = vrot.lane.b32.xlu0 %v1416, 80
        %v1426 = vpop.permute.xlu0 %1425
        %1427 = vrot.lane.b32.xlu0 %v1420, 80
        %v1428 = vpop.permute.xlu0 %1427
        %v1429 = vsel %vm561, %v1422, %v1424
        %v1430 = vsel %vm561, %v1424, %v1426
        %v1431 = vsel %vm561, %v1426, %v1428
        %1435 = vst [vmem:[#allocation2 + $0x78] sm:$0xf] %v1429
        %1436 = vst [vmem:[#allocation2 + $0x80] sm:$0xf] %v1430
        %1437 = vst [vmem:[#allocation2 + $0x88] sm:$0xf] %v1431
        %v1438 = vld [vmem:[#allocation3] sm:$0xff]
        %v1439 = vld [vmem:[#allocation3 + $0x8] sm:$0xff]
        %v1442 = vcombine.low %v1438, %v1438
        %v1443 = vcombine.low %v1439, %v1439
        %1444 = vrot.lane.b32.xlu0 %v1442, 79
        %v1445 = vpop.permute.xlu0 %1444
        %1446 = vrot.lane.b32.xlu0 %v1438, 79
        %v1447 = vpop.permute.xlu0 %1446
        %1448 = vrot.lane.b32.xlu0 %v1443, 79
        %v1449 = vpop.permute.xlu0 %1448
        %1450 = vrot.lane.b32.xlu0 %v1439, 79
        %v1451 = vpop.permute.xlu0 %1450
        %v1452 = vsel %vm585, %v1445, %v1447
        %v1453 = vsel %vm585, %v1447, %v1449
        %v1454 = vsel %vm585, %v1449, %v1451
        %1458 = vst [vmem:[#allocation2 + $0x78] sm:$0xf0] %v1452
        %1459 = vst [vmem:[#allocation2 + $0x80] sm:$0xf0] %v1453
        %1460 = vst [vmem:[#allocation2 + $0x88] sm:$0xf0] %v1454
        %v1461 = vld [vmem:[#allocation3] sm:$0xff]
        %v1462 = vld [vmem:[#allocation3 + $0x8] sm:$0xff]
        %v1465 = vcombine.high %v1461, %v1461
        %v1466 = vcombine.high %v1462, %v1462
        %1467 = vrot.lane.b32.xlu0 %v1461, 78
        %v1468 = vpop.permute.xlu0 %1467
        %1469 = vrot.lane.b32.xlu0 %v1465, 78
        %v1470 = vpop.permute.xlu0 %1469
        %1471 = vrot.lane.b32.xlu0 %v1462, 78
        %v1472 = vpop.permute.xlu0 %1471
        %1473 = vrot.lane.b32.xlu0 %v1466, 78
        %v1474 = vpop.permute.xlu0 %1473
        %v1475 = vsel %vm609, %v1468, %v1470
        %v1476 = vsel %vm609, %v1470, %v1472
        %v1477 = vsel %vm609, %v1472, %v1474
        %1481 = vst [vmem:[#allocation2 + $0x90] sm:$0xf] %v1475
        %1482 = vst [vmem:[#allocation2 + $0x98] sm:$0xf] %v1476
        %1483 = vst [vmem:[#allocation2 + $0xa0] sm:$0xf] %v1477
        %v1484 = vld [vmem:[#allocation3] sm:$0xff]
        %v1485 = vld [vmem:[#allocation3 + $0x8] sm:$0xff]
        %v1488 = vcombine.low %v1484, %v1484
        %v1489 = vcombine.low %v1485, %v1485
        %1490 = vrot.lane.b32.xlu0 %v1488, 77
        %v1491 = vpop.permute.xlu0 %1490
        %1492 = vrot.lane.b32.xlu0 %v1484, 77
        %v1493 = vpop.permute.xlu0 %1492
        %1494 = vrot.lane.b32.xlu0 %v1489, 77
        %v1495 = vpop.permute.xlu0 %1494
        %1496 = vrot.lane.b32.xlu0 %v1485, 77
        %v1497 = vpop.permute.xlu0 %1496
        %v1498 = vsel %vm633, %v1491, %v1493
        %v1499 = vsel %vm633, %v1493, %v1495
        %v1500 = vsel %vm633, %v1495, %v1497
        %1504 = vst [vmem:[#allocation2 + $0x90] sm:$0xf0] %v1498
        %1505 = vst [vmem:[#allocation2 + $0x98] sm:$0xf0] %v1499
        %1506 = vst [vmem:[#allocation2 + $0xa0] sm:$0xf0] %v1500
        %v1507 = vld [vmem:[#allocation3] sm:$0xff]
        %v1508 = vld [vmem:[#allocation3 + $0x8] sm:$0xff]
        %v1511 = vcombine.high %v1507, %v1507
        %v1512 = vcombine.high %v1508, %v1508
        %1513 = vrot.lane.b32.xlu0 %v1507, 76
        %v1514 = vpop.permute.xlu0 %1513
        %1515 = vrot.lane.b32.xlu0 %v1511, 76
        %v1516 = vpop.permute.xlu0 %1515
        %1517 = vrot.lane.b32.xlu0 %v1508, 76
        %v1518 = vpop.permute.xlu0 %1517
        %1519 = vrot.lane.b32.xlu0 %v1512, 76
        %v1520 = vpop.permute.xlu0 %1519
        %v1521 = vsel %vm657, %v1514, %v1516
        %v1522 = vsel %vm657, %v1516, %v1518
        %v1523 = vsel %vm657, %v1518, %v1520
        %1527 = vst [vmem:[#allocation2 + $0xa8] sm:$0xf] %v1521
        %1528 = vst [vmem:[#allocation2 + $0xb0] sm:$0xf] %v1522
        %1529 = vst [vmem:[#allocation2 + $0xb8] sm:$0xf] %v1523
        %v1530 = vld [vmem:[#allocation3] sm:$0xff]
        %v1531 = vld [vmem:[#allocation3 + $0x8] sm:$0xff]
        %v1534 = vcombine.low %v1530, %v1530
        %v1535 = vcombine.low %v1531, %v1531
        %1536 = vrot.lane.b32.xlu0 %v1534, 56
        %v1537 = vpop.permute.xlu0 %1536
        %1538 = vrot.lane.b32.xlu0 %v1530, 56
        %v1539 = vpop.permute.xlu0 %1538
        %1540 = vrot.lane.b32.xlu0 %v1535, 56
        %v1541 = vpop.permute.xlu0 %1540
        %1542 = vrot.lane.b32.xlu0 %v1531, 56
        %v1543 = vpop.permute.xlu0 %1542
        %v1544 = vsel %vm681, %v1537, %v1539
        %v1545 = vsel %vm681, %v1539, %v1541
        %v1546 = vsel %vm681, %v1541, %v1543
        %1550 = vst [vmem:[#allocation2 + $0xa8] sm:$0xf0] %v1544
        %1551 = vst [vmem:[#allocation2 + $0xb0] sm:$0xf0] %v1545
        %1552 = vst [vmem:[#allocation2 + $0xb8] sm:$0xf0] %v1546
        %v1553 = vld [vmem:[#allocation3] sm:$0xff]
        %v1554 = vld [vmem:[#allocation3 + $0x8] sm:$0xff]
        %v1557 = vcombine.high %v1553, %v1553
        %v1558 = vcombine.high %v1554, %v1554
        %1559 = vrot.lane.b32.xlu0 %v1553, 55
        %v1560 = vpop.permute.xlu0 %1559
        %1561 = vrot.lane.b32.xlu0 %v1557, 55
        %v1562 = vpop.permute.xlu0 %1561
        %1563 = vrot.lane.b32.xlu0 %v1554, 55
        %v1564 = vpop.permute.xlu0 %1563
        %1565 = vrot.lane.b32.xlu0 %v1558, 55
        %v1566 = vpop.permute.xlu0 %1565
        %v1567 = vsel %vm705, %v1560, %v1562
        %v1568 = vsel %vm705, %v1562, %v1564
        %v1569 = vsel %vm705, %v1564, %v1566
        %1573 = vst [vmem:[#allocation2 + $0xc0] sm:$0xf] %v1567
        %1574 = vst [vmem:[#allocation2 + $0xc8] sm:$0xf] %v1568
        %1575 = vst [vmem:[#allocation2 + $0xd0] sm:$0xf] %v1569
        %v1576 = vld [vmem:[#allocation3] sm:$0xff]
        %v1577 = vld [vmem:[#allocation3 + $0x8] sm:$0xff]
        %v1580 = vcombine.low %v1576, %v1576
        %v1581 = vcombine.low %v1577, %v1577
        %1582 = vrot.lane.b32.xlu0 %v1580, 54
        %v1583 = vpop.permute.xlu0 %1582
        %1584 = vrot.lane.b32.xlu0 %v1576, 54
        %v1585 = vpop.permute.xlu0 %1584
        %1586 = vrot.lane.b32.xlu0 %v1581, 54
        %v1587 = vpop.permute.xlu0 %1586
        %1588 = vrot.lane.b32.xlu0 %v1577, 54
        %v1589 = vpop.permute.xlu0 %1588
        %v1590 = vsel %vm729, %v1583, %v1585
        %v1591 = vsel %vm729, %v1585, %v1587
        %v1592 = vsel %vm729, %v1587, %v1589
        %1596 = vst [vmem:[#allocation2 + $0xc0] sm:$0xf0] %v1590
        %1597 = vst [vmem:[#allocation2 + $0xc8] sm:$0xf0] %v1591
        %1598 = vst [vmem:[#allocation2 + $0xd0] sm:$0xf0] %v1592
        %v1599 = vld [vmem:[#allocation3] sm:$0xff]
        %v1600 = vld [vmem:[#allocation3 + $0x8] sm:$0xff]
        %v1603 = vcombine.high %v1599, %v1599
        %v1604 = vcombine.high %v1600, %v1600
        %1605 = vrot.lane.b32.xlu0 %v1599, 53
        %v1606 = vpop.permute.xlu0 %1605
        %1607 = vrot.lane.b32.xlu0 %v1603, 53
        %v1608 = vpop.permute.xlu0 %1607
        %1609 = vrot.lane.b32.xlu0 %v1600, 53
        %v1610 = vpop.permute.xlu0 %1609
        %1611 = vrot.lane.b32.xlu0 %v1604, 53
        %v1612 = vpop.permute.xlu0 %1611
        %v1613 = vsel %vm753, %v1606, %v1608
        %v1614 = vsel %vm753, %v1608, %v1610
        %v1615 = vsel %vm753, %v1610, %v1612
        %1619 = vst [vmem:[#allocation2 + $0xd8] sm:$0xf] %v1613
        %1620 = vst [vmem:[#allocation2 + $0xe0] sm:$0xf] %v1614
        %1621 = vst [vmem:[#allocation2 + $0xe8] sm:$0xf] %v1615
        %v1622 = vld [vmem:[#allocation3] sm:$0xff]
        %v1623 = vld [vmem:[#allocation3 + $0x8] sm:$0xff]
        %v1626 = vcombine.low %v1622, %v1622
        %v1627 = vcombine.low %v1623, %v1623
        %1628 = vrot.lane.b32.xlu0 %v1626, 52
        %v1629 = vpop.permute.xlu0 %1628
        %1630 = vrot.lane.b32.xlu0 %v1622, 52
        %v1631 = vpop.permute.xlu0 %1630
        %1632 = vrot.lane.b32.xlu0 %v1627, 52
        %v1633 = vpop.permute.xlu0 %1632
        %1634 = vrot.lane.b32.xlu0 %v1623, 52
        %v1635 = vpop.permute.xlu0 %1634
        %v1636 = vsel %vm777, %v1629, %v1631
        %v1637 = vsel %vm777, %v1631, %v1633
        %v1638 = vsel %vm777, %v1633, %v1635
        %1642 = vst [vmem:[#allocation2 + $0xd8] sm:$0xf0] %v1636
        %1643 = vst [vmem:[#allocation2 + $0xe0] sm:$0xf0] %v1637
        %1644 = vst [vmem:[#allocation2 + $0xe8] sm:$0xf0] %v1638
        %v1645 = vld [vmem:[#allocation3] sm:$0xff]
        %v1646 = vld [vmem:[#allocation3 + $0x8] sm:$0xff]
        %v1649 = vcombine.high %v1645, %v1645
        %v1650 = vcombine.high %v1646, %v1646
        %1651 = vrot.lane.b32.xlu0 %v1645, 32
        %v1652 = vpop.permute.xlu0 %1651
        %1653 = vrot.lane.b32.xlu0 %v1649, 32
        %v1654 = vpop.permute.xlu0 %1653
        %1655 = vrot.lane.b32.xlu0 %v1646, 32
        %v1656 = vpop.permute.xlu0 %1655
        %1657 = vrot.lane.b32.xlu0 %v1650, 32
        %v1658 = vpop.permute.xlu0 %1657
        %v1659 = vsel %vm801, %v1652, %v1654
        %v1660 = vsel %vm801, %v1654, %v1656
        %v1661 = vsel %vm801, %v1656, %v1658
        %1665 = vst [vmem:[#allocation2 + $0xf0] sm:$0xf] %v1659
        %1666 = vst [vmem:[#allocation2 + $0xf8] sm:$0xf] %v1660
        %1667 = vst [vmem:[#allocation2 + $0x100] sm:$0xf] %v1661
        %v1668 = vld [vmem:[#allocation3] sm:$0xff]
        %v1669 = vld [vmem:[#allocation3 + $0x8] sm:$0xff]
        %v1672 = vcombine.low %v1668, %v1668
        %v1673 = vcombine.low %v1669, %v1669
        %1674 = vrot.lane.b32.xlu0 %v1672, 31
        %v1675 = vpop.permute.xlu0 %1674
        %1676 = vrot.lane.b32.xlu0 %v1668, 31
        %v1677 = vpop.permute.xlu0 %1676
        %1678 = vrot.lane.b32.xlu0 %v1673, 31
        %v1679 = vpop.permute.xlu0 %1678
        %1680 = vrot.lane.b32.xlu0 %v1669, 31
        %v1681 = vpop.permute.xlu0 %1680
        %v1682 = vsel %vm825, %v1675, %v1677
        %v1683 = vsel %vm825, %v1677, %v1679
        %v1684 = vsel %vm825, %v1679, %v1681
        %1688 = vst [vmem:[#allocation2 + $0xf0] sm:$0xf0] %v1682
        %1689 = vst [vmem:[#allocation2 + $0xf8] sm:$0xf0] %v1683
        %1690 = vst [vmem:[#allocation2 + $0x100] sm:$0xf0] %v1684
        %v1691 = vld [vmem:[#allocation3] sm:$0xff]
        %v1692 = vld [vmem:[#allocation3 + $0x8] sm:$0xff]
        %v1695 = vcombine.high %v1691, %v1691
        %v1696 = vcombine.high %v1692, %v1692
        %1697 = vrot.lane.b32.xlu0 %v1691, 30
        %v1698 = vpop.permute.xlu0 %1697
        %1699 = vrot.lane.b32.xlu0 %v1695, 30
        %v1700 = vpop.permute.xlu0 %1699
        %1701 = vrot.lane.b32.xlu0 %v1692, 30
        %v1702 = vpop.permute.xlu0 %1701
        %1703 = vrot.lane.b32.xlu0 %v1696, 30
        %v1704 = vpop.permute.xlu0 %1703
        %v1705 = vsel %vm849, %v1698, %v1700
        %v1706 = vsel %vm849, %v1700, %v1702
        %v1707 = vsel %vm849, %v1702, %v1704
        %1711 = vst [vmem:[#allocation2 + $0x108] sm:$0xf] %v1705
        %1712 = vst [vmem:[#allocation2 + $0x110] sm:$0xf] %v1706
        %1713 = vst [vmem:[#allocation2 + $0x118] sm:$0xf] %v1707
        %v1714 = vld [vmem:[#allocation3] sm:$0xff]
        %v1715 = vld [vmem:[#allocation3 + $0x8] sm:$0xff]
        %v1718 = vcombine.low %v1714, %v1714
        %v1719 = vcombine.low %v1715, %v1715
        %1720 = vrot.lane.b32.xlu0 %v1718, 29
        %v1721 = vpop.permute.xlu0 %1720
        %1722 = vrot.lane.b32.xlu0 %v1714, 29
        %v1723 = vpop.permute.xlu0 %1722
        %1724 = vrot.lane.b32.xlu0 %v1719, 29
        %v1725 = vpop.permute.xlu0 %1724
        %1726 = vrot.lane.b32.xlu0 %v1715, 29
        %v1727 = vpop.permute.xlu0 %1726
        %v1728 = vsel %vm873, %v1721, %v1723
        %v1729 = vsel %vm873, %v1723, %v1725
        %v1730 = vsel %vm873, %v1725, %v1727
        %1734 = vst [vmem:[#allocation2 + $0x108] sm:$0xf0] %v1728
        %1735 = vst [vmem:[#allocation2 + $0x110] sm:$0xf0] %v1729
        %1736 = vst [vmem:[#allocation2 + $0x118] sm:$0xf0] %v1730
        %v1737 = vld [vmem:[#allocation3] sm:$0xff]
        %v1738 = vld [vmem:[#allocation3 + $0x8] sm:$0xff]
        %v1741 = vcombine.high %v1737, %v1737
        %v1742 = vcombine.high %v1738, %v1738
        %1743 = vrot.lane.b32.xlu0 %v1737, 28
        %v1744 = vpop.permute.xlu0 %1743
        %1745 = vrot.lane.b32.xlu0 %v1741, 28
        %v1746 = vpop.permute.xlu0 %1745
        %1747 = vrot.lane.b32.xlu0 %v1738, 28
        %v1748 = vpop.permute.xlu0 %1747
        %1749 = vrot.lane.b32.xlu0 %v1742, 28
        %v1750 = vpop.permute.xlu0 %1749
        %v1751 = vsel %vm897, %v1744, %v1746
        %v1752 = vsel %vm897, %v1746, %v1748
        %v1753 = vsel %vm897, %v1748, %v1750
        %1757 = vst [vmem:[#allocation2 + $0x120] sm:$0xf] %v1751
        %1758 = vst [vmem:[#allocation2 + $0x128] sm:$0xf] %v1752
        %1759 = vst [vmem:[#allocation2 + $0x130] sm:$0xf] %v1753
        %v1760 = vld [vmem:[%s5] sm:$0xf]
        %v1761 = vld [vmem:[#allocation2] sm:$0xff]
        %v1762 = vld [vmem:[#allocation2 + $0x8] sm:$0xff]
        %v1763 = vld [vmem:[#allocation2 + $0x10] sm:$0xff]
        %v1764 = vld [vmem:[#allocation2 + $0x18] sm:$0xff]
        %v1765 = vld [vmem:[#allocation2 + $0x20] sm:$0xff]
        %v1766 = vld [vmem:[#allocation2 + $0x28] sm:$0xff]
        %v1767 = vld [vmem:[#allocation2 + $0x30] sm:$0xff]
        %v1768 = vld [vmem:[#allocation2 + $0x38] sm:$0xff]
        %v1769 = vld [vmem:[#allocation2 + $0x40] sm:$0xff]
        %v1770 = vld [vmem:[#allocation2 + $0x48] sm:$0xff]
        %v1771 = vld [vmem:[#allocation2 + $0x50] sm:$0xff]
        %v1772 = vld [vmem:[#allocation2 + $0x58] sm:$0xff]
        %v1773 = vld [vmem:[#allocation2 + $0x60] sm:$0xff]
        %v1774 = vld [vmem:[#allocation2 + $0x68] sm:$0xff]
        %v1775 = vld [vmem:[#allocation2 + $0x70] sm:$0xff]
        %v1776 = vld [vmem:[#allocation2 + $0x78] sm:$0xff]
        %v1777 = vld [vmem:[#allocation2 + $0x80] sm:$0xff]
        %v1778 = vld [vmem:[#allocation2 + $0x88] sm:$0xff]
        %v1779 = vld [vmem:[#allocation2 + $0x90] sm:$0xff]
        %v1780 = vld [vmem:[#allocation2 + $0x98] sm:$0xff]
        %v1781 = vld [vmem:[#allocation2 + $0xa0] sm:$0xff]
        %v1782 = vld [vmem:[#allocation2 + $0xa8] sm:$0xff]
        %v1783 = vld [vmem:[#allocation2 + $0xb0] sm:$0xff]
        %v1784 = vld [vmem:[#allocation2 + $0xb8] sm:$0xff]
        %v1785 = vld [vmem:[#allocation2 + $0xc0] sm:$0xff]
        %v1786 = vld [vmem:[#allocation2 + $0xc8] sm:$0xff]
        %v1787 = vld [vmem:[#allocation2 + $0xd0] sm:$0xff]
        %v1788 = vld [vmem:[#allocation2 + $0xd8] sm:$0xff]
        %v1789 = vld [vmem:[#allocation2 + $0xe0] sm:$0xff]
        %v1790 = vld [vmem:[#allocation2 + $0xe8] sm:$0xff]
        %v1791 = vld [vmem:[#allocation2 + $0xf0] sm:$0xff]
        %v1792 = vld [vmem:[#allocation2 + $0xf8] sm:$0xff]
        %v1793 = vld [vmem:[#allocation2 + $0x100] sm:$0xff]
        %v1794 = vld [vmem:[#allocation2 + $0x108] sm:$0xff]
        %v1795 = vld [vmem:[#allocation2 + $0x110] sm:$0xff]
        %v1796 = vld [vmem:[#allocation2 + $0x118] sm:$0xff]
        %v1797 = vld [vmem:[#allocation2 + $0x120] sm:$0xf]
        %v1798 = vld [vmem:[#allocation2 + $0x128] sm:$0xf]
        %v1799 = vld [vmem:[#allocation2 + $0x130] sm:$0xf]
        %v1801 = vsel %vm537, %v1760, 0
        %v1804 = vsel %vm950, %v1797, 0
        %v1807 = vsel %vm950, %v1798, 0
        %v1810 = vsel %vm950, %v1799, 0
        %1812 = vmatprep.subr.mxu0 %v1762
        %1813 = vmatpush1.msra.mxu0 %v1761
        %1814 = vmatprep.subr.mxu0 %v1765
        %1815 = vmatpush1.msra.mxu0 %v1764
        %1816 = vmatprep.subr.mxu0 %v1768
        %1817 = vmatpush1.msra.mxu0 %v1767
        %1818 = vmatprep.subr.mxu0 %v1771
        %1819 = vmatpush1.msra.mxu0 %v1770
        %1820 = vmatprep.subr.mxu0 %v1774
        %1821 = vmatpush1.msra.mxu0 %v1773
        %1822 = vmatprep.subr.mxu0 %v1777
        %1823 = vmatpush1.msra.mxu0 %v1776
        %1824 = vmatprep.subr.mxu0 %v1780
        %1825 = vmatpush1.msra.mxu0 %v1779
        %1826 = vmatprep.subr.mxu0 %v1783
        %1827 = vmatpush1.msra.mxu0 %v1782
        %1828 = vmatprep.subr.mxu0 %v1786
        %1829 = vmatpush1.msra.mxu0 %v1785
        %1830 = vmatprep.subr.mxu0 %v1789
        %1831 = vmatpush1.msra.mxu0 %v1788
        %1832 = vmatprep.subr.mxu0 %v1792
        %1833 = vmatpush1.msra.mxu0 %v1791
        %1834 = vmatprep.subr.mxu0 %v1795
        %1835 = vmatpush1.msra.mxu0 %v1794
        %1836 = vmatprep.subr.mxu0 %v1807
        %1837 = vmatpush1.msra.mxu0 %v1804
        %1838 = vmatprep.subr.mxu0 0.0
        %1839 = vmatpush1.msra.mxu0 0.0
        %1840 = vmatprep.subr.mxu0 0.0
        %1841 = vmatpush1.msra.mxu0 0.0
        %1842 = vmatprep.subr.mxu0 0.0
        %1843 = vmatpush1.msra.mxu0 0.0
        %1844 = vmatprep.subr.mxu0 0.0
        %1845 = vmatpush1.msra.mxu0 0.0
        %1846 = vmatprep.subr.mxu0 0.0
        %1847 = vmatpush1.msra.mxu0 0.0
        %1848 = vmatprep.subr.mxu0 0.0
        %1849 = vmatpush1.msra.mxu0 0.0
        %1850 = vmatprep.subr.mxu0 0.0
        %1851 = vmatpush1.msra.mxu0 0.0
        %1852 = vmatprep.subr.mxu0 0.0
        %1853 = vmatpush1.msra.mxu0 0.0
        %1854 = vmatprep.subr.mxu0 0.0
        %1855 = vmatpush1.msra.mxu0 0.0
        %1856 = vmatprep.subr.mxu0 0.0
        %1857 = vmatpush1.msra.mxu0 0.0
        %1858 = vmatprep.subr.mxu0 0.0
        %1859 = vmatpush1.msra.mxu0 0.0
        %1860 = vmatprep.subr.mxu0 0.0
        %1861 = vmatpush1.msra.mxu0 0.0
        %1862 = vmatprep.subr.mxu0 0.0
        %1863 = vmatpush1.msra.mxu0 0.0
        %1864 = vmatprep.subr.mxu0 0.0
        %1865 = vmatpush1.msra.mxu0 0.0
        %1866 = vmatprep.subr.mxu0 0.0
        %1867 = vmatpush1.msra.mxu0 0.0
        %1868 = vmatprep.subr.mxu0 0.0
        %1869 = vmatpush1.msra.mxu0 0.0
        %1870 = vmatprep.subr.mxu0 0.0
        %1871 = vmatpush1.msra.mxu0 0.0
        %1872 = vmatprep.subr.mxu0 0.0
        %1873 = vmatpush1.msra.mxu0 0.0
        %1874 = vmatprep.subr.mxu0 0.0
        %1875 = vmatpush1.msra.mxu0 0.0
        %1876 = vmatprep.mubr.f32.mxu0 0.0
        %1877 = vmatmul.mubr.f32.gmra.mrb[0].mxu0 %v1801
        %v1878 = vpop.f32.mrb[0].mxu0
        %v1879 = vadd.f32 0.0, %v1878
        %v1880 = vpop.f32.mrb[0].mxu0
        %v1881 = vadd.f32 0.0, %v1880
        %1882 = vdwg.mxu0
        %1883 = vmatprep.subr.mxu0 0.0
        %1884 = vmatpush1.msra.mxu0 %v1763
        %1885 = vmatprep.subr.mxu0 0.0
        %1886 = vmatpush1.msra.mxu0 %v1766
        %1887 = vmatprep.subr.mxu0 0.0
        %1888 = vmatpush1.msra.mxu0 %v1769
        %1889 = vmatprep.subr.mxu0 0.0
        %1890 = vmatpush1.msra.mxu0 %v1772
        %1891 = vmatprep.subr.mxu0 0.0
        %1892 = vmatpush1.msra.mxu0 %v1775
        %1893 = vmatprep.subr.mxu0 0.0
        %1894 = vmatpush1.msra.mxu0 %v1778
        %1895 = vmatprep.subr.mxu0 0.0
        %1896 = vmatpush1.msra.mxu0 %v1781
        %1897 = vmatprep.subr.mxu0 0.0
        %1898 = vmatpush1.msra.mxu0 %v1784
        %1899 = vmatprep.subr.mxu0 0.0
        %1900 = vmatpush1.msra.mxu0 %v1787
        %1901 = vmatprep.subr.mxu0 0.0
        %1902 = vmatpush1.msra.mxu0 %v1790
        %1903 = vmatprep.subr.mxu0 0.0
        %1904 = vmatpush1.msra.mxu0 %v1793
        %1905 = vmatprep.subr.mxu0 0.0
        %1906 = vmatpush1.msra.mxu0 %v1796
        %1907 = vmatprep.subr.mxu0 0.0
        %1908 = vmatpush1.msra.mxu0 %v1810
        %1909 = vmatprep.subr.mxu0 0.0
        %1910 = vmatpush1.msra.mxu0 0.0
        %1911 = vmatprep.subr.mxu0 0.0
        %1912 = vmatpush1.msra.mxu0 0.0
        %1913 = vmatprep.subr.mxu0 0.0
        %1914 = vmatpush1.msra.mxu0 0.0
        %1915 = vmatprep.subr.mxu0 0.0
        %1916 = vmatpush1.msra.mxu0 0.0
        %1917 = vmatprep.subr.mxu0 0.0
        %1918 = vmatpush1.msra.mxu0 0.0
        %1919 = vmatprep.subr.mxu0 0.0
        %1920 = vmatpush1.msra.mxu0 0.0
        %1921 = vmatprep.subr.mxu0 0.0
        %1922 = vmatpush1.msra.mxu0 0.0
        %1923 = vmatprep.subr.mxu0 0.0
        %1924 = vmatpush1.msra.mxu0 0.0
        %1925 = vmatprep.subr.mxu0 0.0
        %1926 = vmatpush1.msra.mxu0 0.0
        %1927 = vmatprep.subr.mxu0 0.0
        %1928 = vmatpush1.msra.mxu0 0.0
        %1929 = vmatprep.subr.mxu0 0.0
        %1930 = vmatpush1.msra.mxu0 0.0
        %1931 = vmatprep.subr.mxu0 0.0
        %1932 = vmatpush1.msra.mxu0 0.0
        %1933 = vmatprep.subr.mxu0 0.0
        %1934 = vmatpush1.msra.mxu0 0.0
        %1935 = vmatprep.subr.mxu0 0.0
        %1936 = vmatpush1.msra.mxu0 0.0
        %1937 = vmatprep.subr.mxu0 0.0
        %1938 = vmatpush1.msra.mxu0 0.0
        %1939 = vmatprep.subr.mxu0 0.0
        %1940 = vmatpush1.msra.mxu0 0.0
        %1941 = vmatprep.subr.mxu0 0.0
        %1942 = vmatpush1.msra.mxu0 0.0
        %1943 = vmatprep.subr.mxu0 0.0
        %1944 = vmatpush1.msra.mxu0 0.0
        %1945 = vmatprep.subr.mxu0 0.0
        %1946 = vmatpush1.msra.mxu0 0.0
        %1947 = vmatprep.mubr.f32.mxu0 0.0
        %1948 = vmatmul.mubr.f32.gmra.mrb[0].mxu0 %v1801
        %v1949 = vpop.f32.mrb[0].mxu0
        %v1950 = vadd.f32 0.0, %v1949
        %v1951 = vpop.f32.mrb[0].mxu0
        %1952 = vdwg.mxu0
        %v1953 = vmul.f32 %v1879, %v1105
        %v1954 = vmul.f32 %v1881, %v1109
        %v1955 = vmul.f32 %v1950, %v1113
        %v1956 = vsel %vm950, %v1953, 0.0
        %v1957 = vsel %vm950, %v1954, 0.0
        %v1958 = vadd.f32 %v1956, %v1957
        %v1959 = vsel %vm950, %v1955, 0.0
        %v1960 = vadd.f32 %v1958, %v1959
        %1961 = vadd.xlane.f32.xlu0 %v1960
        %v1962 = vpop.xlane.xlu0 %1961
        %v1963 = vmul.f32 %v1953, %v1879
        %v1964 = vmul.f32 %v1954, %v1881
        %v1965 = vmul.f32 %v1955, %v1950
        %v1966 = vsel %vm950, %v1963, 0.0
        %v1967 = vsel %vm950, %v1964, 0.0
        %v1968 = vadd.f32 %v1966, %v1967
        %v1969 = vsel %vm950, %v1965, 0.0
        %v1970 = vadd.f32 %v1968, %v1969
        %1971 = vadd.xlane.f32.xlu0 %v1970
        %v1972 = vpop.xlane.xlu0 %1971
        %v1973 = vmul.f32 %v1962, 0.00390625
        %v1974 = vmul.f32 %v1972, 0.00390625
        %v1975 = vmul.f32 %v1973, %v1973
        %v1976 = vsub.f32 %v1974, %v1975
        %v1977 = vsub.f32 %v1879, %v1973
        %v1978 = vsub.f32 %v1881, %v1973
        %v1979 = vsub.f32 %v1950, %v1973
        %v1980 = vadd.f32 %v1976, 1e-05
        %v1981 = vrsqrt.pop %v1980
        %v1982 = vmul.f32 %v1977, %v1981
        %v1983 = vmul.f32 %v1978, %v1981
        %v1984 = vmul.f32 %v1979, %v1981
        %v1985 = vld [vmem:[%s6] sm:$0xf]
        %1987 = vset.pattern.permute.xlu0 0
        %1988 = vperm.xlu0 %1987, %v1985
        %v1989 = vpop.permute.xlu0 %1988
        %v1991 = vmul.f32 %v1982, %v1989
        %v1992 = vmul.f32 %v1983, %v1989
        %v1993 = vmul.f32 %v1984, %v1989
        %v1994 = vld [vmem:[%s7] sm:$0xf]
        %1996 = vset.pattern.permute.xlu0 0
        %1997 = vperm.xlu0 %1996, %v1994
        %v1998 = vpop.permute.xlu0 %1997
        %v2000 = vadd.f32 %v1991, %v1998
        %v2001 = vadd.f32 %v1992, %v1998
        %v2002 = vadd.f32 %v1993, %v1998
        %v2003 = vld [vmem:[%s289] sm:$0xff]
        %v2004 = vld [vmem:[%s289 + $0x8] sm:$0xff]
        %v2008 = vcombine.low %v2000, %v2001
        %2009 = vrot.lane.b32.xlu0 %v2008, 50
        %v2010 = vpop.permute.xlu0 %2009
        %2011 = vrot.lane.b32.xlu0 %v2002, 50
        %v2012 = vpop.permute.xlu0 %2011
        %v2013 = vrot.slane %v2010, 4
        %v2014 = vrot.slane %v2012, 4
        %v2015 = vsel %vm1187, %v2013, %v2010
        %v2016 = vsel %vm950, %v2013, %v2014
        %v2017 = vsel %vm1187, %v2016, %v2012
        %v2020 = vadd.f32 %v2003, %v2015
        %v2021 = vadd.f32 %v2004, %v2017
        %2024 = vrot.lane.b32.xlu0 %v2020, 78
        %v2025 = vpop.permute.xlu0 %2024
        %2026 = vrot.lane.b32.xlu0 %v2021, 78
        %v2027 = vpop.permute.xlu0 %2026
        %v2028 = vrot.slane %v2025, 4
        %v2029 = vrot.slane %v2027, 4
        %v2030 = vsel %vm950, %v2028, %v2029
        %v2031 = vsel %vm609, %v2025, %v2030
        %v2032 = vsel %vm609, %v2027, %v2029
        %2035 = vst [vmem:[%s321] sm:$0xff] %v2031
        %2036 = vst [vmem:[%s321 + $0x8] sm:$0xf] %v2032
        %s2037 = sand.u32 %s206, 1
        %s2038 = scalar_lea.sflag [#allocation6], %s2037
        %s2039 = sand.u32 %s206, 1
        %s2040 = smul.addr %s2039, 12
        %s2041 = scalar_lea.vmem [#allocation7], %s2040
        // Predicated region
        $region57: #{tpu_custom_call.1} parent=51 // pred_check
          %p2042 = pneg %p216
        $region58: #{tpu_custom_call.1} parent=51 // pred_check_branch
          %2044 = sbr.rel (%p2042) target = $region60
        $region59: #{tpu_custom_call.1} parent=51 // pred_region
          %s2046 = ssub.s32 192, 192
          %2047 = vsyncadd %s2038, %s2046
          %s2048 = smul.addr %s25, 3
          %s2049 = smul.addr %s2048, 64
          %s2050 = scalar_lea.hbm %s8, %s2049
          %s2052 = sshll.u32 %s2041, 4
          %s2053 = int_to_ptr.vmem [resolvable:$true] %s2052
          %2055 = dma.vmem_to_hbm [thread:$0]  %s2053, 192, %s2050, %s2038
        $region60: #{tpu_custom_call.1} parent=51 // pred_fallthru
          _
      $region52: #{tpu_custom_call.1} parent=5 // pred_fallthru
        _
      %p2056 = scmp.le.s32.totalorder 2, %s20
      // Predicated region
      $region61: #{tpu_custom_call.1} parent=5 // pred_check
        %p2057 = pneg %p2056
      $region62: #{tpu_custom_call.1} parent=5 // pred_check_branch
        %2059 = sbr.rel (%p2057) target = $region64
      $region63: #{tpu_custom_call.1} parent=5 // pred_region
        %s2060 = ssub.s32 %s20, 2
        // Predicated region
        $region65: #{tpu_custom_call.1} parent=63 // pred_check
          %p2061 = pneg %p222
        $region66: #{tpu_custom_call.1} parent=63 // pred_check_branch
          %2063 = sbr.rel (%p2061) target = $region68
        $region67: #{tpu_custom_call.1} parent=63 // pred_region
          %s2064 = sand.u32 %s207, 1
          %s2065 = scalar_lea.sflag [#allocation6], %s2064
          %s2066 = sand.u32 %s207, 1
          %s2067 = smul.addr %s2066, 12
          %s2068 = scalar_lea.vmem [#allocation7], %s2067
          %2069 = dma.done %s2065, 192
        $region68: #{tpu_custom_call.1} parent=63 // pred_fallthru
          _
      $region64: #{tpu_custom_call.1} parent=5 // pred_fallthru
        _
    $region6: #{tpu_custom_call.1} parent=1 // loop_footer
      %s24 = sadd.s32 1, %s20
    $region7: #{tpu_custom_call.1} parent=1 // loop_footer_branch
      %19 = sbr.rel target = $region3
    $region8: #{tpu_custom_call.1} parent=1 // loop_exit
      _
    %2070 = vsyncpa [#allocation5], 1
    %s2071 = scalar_lea.sflag [#allocation5], 1
    %2072 = vsyncpa %s2071, 1
    %2073 = vsyncpa [#allocation6], 1
    %s2074 = scalar_lea.sflag [#allocation6], 1
    %2075 = vsyncpa %s2074, 1

</llo_original>
